<compile_context>
chip_gen: v7x
topology: tpu7x:2x2x1
jax: 0.10.0
libtpu: 0.0.40
codegen_flags: <defaults>
</compile_context>

<pallas_src>
import jax
import jax.numpy as jnp
from jax.experimental import pallas as pl
from jax.experimental.pallas import tpu as pltpu

# ----------------------------- static shapes --------------------------------
B = 2                      # batch
CH = 4                     # input channels (conv1_2 kernel height)
T = 400                    # input time samples (so the final width is 6 and the
                           # module's reshape(-1, 5*6) is consistent)
K1 = 40                    # conv1 kernel width
C1 = 40                    # channels after conv1_2
T1 = T - K1 + 1            # 361
P1K, P1S = 10, 6           # pooling1 kernel / stride (time axis)
T1P = (T1 - P1K) // P1S + 1            # 59
K2 = 20                    # conv2 kernel width
C2 = 5                     # channels after conv2
T2 = T1P - K2 + 1          # 40
P2K, P2S = 20, 4           # pooling2 kernel / stride
T2P = (T2 - P2K) // P2S + 1            # 6
G = 8                      # time-shifts packed wrapper-side into the input
NJ = K1 // G               # 5 shift groups handled in-kernel
BIAS_ROWS = 48             # packed bias rows (40 + 5, padded to sublane tile)
BN_EPS = 1e-5              # PyTorch BatchNorm2d default eps


# --------------------------------- kernel -----------------------------------
def backbone_kernel(x_ref, wa_ref, wb_ref, bias_ref, pm1_ref, pm2_ref, o_ref):
    # ---- stage A: conv1 (1x40) ∘ conv1_2 (chx1) ∘ BN1, folded.
    # x_ref block is (1, G*CH, T): row g*CH + c holds x[c, .+g].  Accumulate
    # NJ=5 matmuls, one per shift-group j (lane offset j*G).
    acc = jnp.dot(wa_ref[0], x_ref[0, :, 0:T1],
                  preferred_element_type=jnp.float32)               # (C1, T1)
    for j in range(1, NJ):
        acc = acc + jnp.dot(wa_ref[j], x_ref[0, :, j * G:j * G + T1],
                            preferred_element_type=jnp.float32)
    a1 = acc + bias_ref[0:C1, :]                                     # folded bias
    a1 = jnp.where(a1 > 0, a1, jnp.exp(jnp.minimum(a1, 0.0)) - 1.0)  # ELU

    # avg-pool (1,10)/(1,6) as a matmul against the precomputed pooling matrix
    p1 = jnp.dot(a1, pm1_ref[...], preferred_element_type=jnp.float32)  # (C1, T1P)
    # TODO(synk): F.dropout is a stochastic training-time op; identity at inference.

    # ---- stage B: conv2 (1x20, no bias) ∘ BN2, folded.
    # One (K2*C2, C1) @ (C1, T1P) matmul, then accumulate the K2 diagonal
    # (C2, T2) bands (row group k*C2, lane offset k).
    g = jnp.dot(wb_ref[...], p1, preferred_element_type=jnp.float32)    # (100, 59)
    acc2 = g[0:C2, 0:T2]
    for k in range(1, K2):
        acc2 = acc2 + g[k * C2:(k + 1) * C2, k:k + T2]
    a2 = acc2 + bias_ref[C1:C1 + C2, :]
    a2 = jnp.where(a2 > 0, a2, jnp.exp(jnp.minimum(a2, 0.0)) - 1.0)     # ELU

    # avg-pool (1,20)/(1,4)
    o_ref[0] = jnp.dot(a2, pm2_ref[...], preferred_element_type=jnp.float32)  # (C2, T2P)


# --------------------------- parameter folding ------------------------------
def fold_params(p):
    """Inference-time folding: (conv1∘conv1_2∘BN1) and (conv2∘BN2)."""
    # stage A
    w1 = p["conv1_w"][:, 0, 0, :]                 # (20, K1)  [i, k]
    w12 = p["conv1_2_w"][:, :, :, 0]              # (C1, 20, CH) [o, i, c]
    wc = jnp.einsum("oic,ik->ock", w12, w1)       # combined conv: (C1, CH, K1)
    bc = jnp.einsum("oic,i->o", w12, p["conv1_b"]) + p["conv1_2_b"]
    s1 = p["bn1_g"] * jax.lax.rsqrt(p["bn1_v"] + BN_EPS)
    wa = wc * s1[:, None, None]                   # (C1, CH, K1)
    ba = s1 * (bc - p["bn1_m"]) + p["bn1_b"]
    # reorder to (NJ, C1, G*CH): element [j, o, g*CH + c] = wa[o, c, k=j*G+g],
    # matching x_pack rows (g*CH + c) sliced at lane offset j*G in the kernel.
    wa = jnp.transpose(wa, (0, 2, 1))             # (C1, K1, CH) [o, k, c]
    wa = wa.reshape(C1, NJ, G, CH)                # [o, j, g, c]
    wa3d = jnp.transpose(wa, (1, 0, 2, 3)).reshape(NJ, C1, G * CH)

    # stage B
    w2 = p["conv2_w"][:, :, 0, :]                 # (C2, C1, K2) [o, c, k]
    s2 = p["bn2_g"] * jax.lax.rsqrt(p["bn2_v"] + BN_EPS)
    wb = w2 * s2[:, None, None]
    bb = p["bn2_b"] - s2 * p["bn2_m"]
    # row order k*C2 + o so the kernel's band sum indexes contiguous row groups
    wb_r = jnp.transpose(wb, (2, 0, 1)).reshape(K2 * C2, C1)          # (100, C1)

    bias = jnp.zeros((BIAS_ROWS, 1), jnp.float32)
    bias = bias.at[0:C1, 0].set(ba)
    bias = bias.at[C1:C1 + C2, 0].set(bb)
    return wa3d.astype(jnp.float32), wb_r.astype(jnp.float32), bias


def pool_matrix(n_in, n_out, k, s):
    """Average-pooling as a dense (n_in, n_out) matrix (built once, wrapper-side)."""
    t = jnp.arange(n_in)[:, None]
    j = jnp.arange(n_out)[None, :]
    return jnp.where((t >= s * j) & (t < s * j + k), 1.0 / k, 0.0).astype(jnp.float32)


# --------------------------------- wrapper ----------------------------------
@jax.jit
def backbone_forward(x, params):
    nb = x.shape[0]
    wa3d, wb_r, bias = fold_params(params)
    pm1 = pool_matrix(T1, T1P, P1K, P1S)
    pm2 = pool_matrix(T2, T2P, P2K, P2S)

    # Pack G time-shifts of the input: x_pack[b, g*CH + c, t] = x[b, c, t+g].
    xf = x.astype(jnp.float32)
    x_pack = jnp.stack(
        [jnp.pad(xf[:, :, g:], ((0, 0), (0, 0), (0, g))) for g in range(G)],
        axis=1).reshape(nb, G * CH, T)

    out = pl.pallas_call(
        backbone_kernel,
        out_shape=jax.ShapeDtypeStruct((nb, C2, T2P), jnp.float32),
        grid=(nb,),
        in_specs=[
            pl.BlockSpec((1, G * CH, T), lambda b: (b, 0, 0)),      # shift-packed x
            pl.BlockSpec((NJ, C1, G * CH), lambda b: (0, 0, 0)),    # fused stage-A weights
            pl.BlockSpec((K2 * C2, C1), lambda b: (0, 0)),          # fused stage-B weights
            pl.BlockSpec((BIAS_ROWS, 1), lambda b: (0, 0)),         # packed biases
            pl.BlockSpec((T1, T1P), lambda b: (0, 0)),              # pooling matrix 1
            pl.BlockSpec((T2, T2P), lambda b: (0, 0)),              # pooling matrix 2
        ],
        out_specs=pl.BlockSpec((1, C2, T2P), lambda b: (b, 0, 0)),
        compiler_params=pltpu.CompilerParams(
            dimension_semantics=("parallel",)),                     # 1 sample / TC on v7x
    )(x_pack, wa3d, wb_r, bias, pm1, pm2)
    return out.reshape(nb, C2 * T2P)


# ------------------------------ parameters ----------------------------------
def make_params(key):
    ks = jax.random.split(key, 13)
    s = 0.1
    return dict(
        conv1_w=s * jax.random.normal(ks[0], (20, 1, 1, K1), jnp.float32),
        conv1_b=s * jax.random.normal(ks[1], (20,), jnp.float32),
        conv1_2_w=s * jax.random.normal(ks[2], (C1, 20, CH, 1), jnp.float32),
        conv1_2_b=s * jax.random.normal(ks[3], (C1,), jnp.float32),
        bn1_g=1.0 + 0.1 * jax.random.normal(ks[4], (C1,), jnp.float32),
        bn1_b=0.1 * jax.random.normal(ks[5], (C1,), jnp.float32),
        bn1_m=0.05 * jax.random.normal(ks[6], (C1,), jnp.float32),
        bn1_v=jax.random.uniform(ks[7], (C1,), jnp.float32, 0.5, 1.5),
        conv2_w=s * jax.random.normal(ks[8], (C2, C1, 1, K2), jnp.float32),
        bn2_g=1.0 + 0.1 * jax.random.normal(ks[9], (C2,), jnp.float32),
        bn2_b=0.1 * jax.random.normal(ks[10], (C2,), jnp.float32),
        bn2_m=0.05 * jax.random.normal(ks[11], (C2,), jnp.float32),
        bn2_v=jax.random.uniform(ks[12], (C2,), jnp.float32, 0.5, 1.5),
    )


# ------------------------------- reference ----------------------------------
def backbone_reference(x, p):
    """Pure-JAX mirror of the PyTorch forward (eval-mode BN, dropout=identity)."""
    xb = x.astype(jnp.float32)
    w1 = p["conv1_w"][:, 0, 0, :]                                       # (20, K1)
    patches = jnp.stack([xb[:, :, k:k + T1] for k in range(K1)], -1)    # (B,CH,T1,K1)
    c1 = jnp.einsum("bctk,ik->bict", patches, w1) + p["conv1_b"][None, :, None, None]
    w12 = p["conv1_2_w"][:, :, :, 0]                                    # (C1,20,CH)
    c12 = jnp.einsum("bict,oic->bot", c1, w12) + p["conv1_2_b"][None, :, None]
    s1 = p["bn1_g"] / jnp.sqrt(p["bn1_v"] + BN_EPS)
    y = s1[None, :, None] * (c12 - p["bn1_m"][None, :, None]) + p["bn1_b"][None, :, None]
    y = jnp.where(y > 0, y, jnp.exp(y) - 1.0)
    y = jnp.stack([y[:, :, P1S * j:P1S * j + P1K].mean(-1) for j in range(T1P)], -1)
    w2 = p["conv2_w"][:, :, 0, :]                                       # (C2,C1,K2)
    patches2 = jnp.stack([y[:, :, k:k + T2] for k in range(K2)], -1)    # (B,C1,T2,K2)
    c2 = jnp.einsum("bctk,ock->bot", patches2, w2)
    s2 = p["bn2_g"] / jnp.sqrt(p["bn2_v"] + BN_EPS)
    z = s2[None, :, None] * (c2 - p["bn2_m"][None, :, None]) + p["bn2_b"][None, :, None]
    z = jnp.where(z > 0, z, jnp.exp(z) - 1.0)
    z = jnp.stack([z[:, :, P2S * j:P2S * j + P2K].mean(-1) for j in range(T2P)], -1)
    return z.reshape(x.shape[0], -1)


if __name__ == "__main__":
    key = jax.random.PRNGKey(0)
    kx, kp = jax.random.split(key)

    x = jax.random.normal(kx, (B, CH, T), dtype=jnp.float32)
    params = make_params(kp)

    out = backbone_forward(x, params)
    out = jax.block_until_ready(out)

    ref = backbone_reference(x, params)
    assert out.shape == (B, C2 * T2P)
    err = float(jnp.max(jnp.abs(out - ref)))
    assert jnp.allclose(out, ref, atol=1e-4, rtol=1e-4), f"mismatch vs reference (max abs err {err})"

    print("KERNEL_OK")
</pallas_src>

<mosaic_0001>
module attributes {stable_mosaic.version = 11 : i64} {
  func.func @backbone_kernel(%arg0: i32, %arg1: memref<1x32x400xf32, #tpu.memory_space<vmem>>, %arg2: memref<5x40x32xf32, #tpu.memory_space<vmem>>, %arg3: memref<100x40xf32, #tpu.memory_space<vmem>>, %arg4: memref<48x1xf32, #tpu.memory_space<vmem>>, %arg5: memref<361x59xf32, #tpu.memory_space<vmem>>, %arg6: memref<40x6xf32, #tpu.memory_space<vmem>>, %arg7: memref<1x5x6xf32, #tpu.memory_space<vmem>>) attributes {dimension_semantics = [#tpu.dimension_semantics<parallel>], iteration_bounds = array<i64: 2>, scalar_prefetch = 0 : i64, scratch_operands = 0 : i64, tpu.core_type = #tpu.core_type<tc>, window_params = [{transform_indices = @transform_0, window_bounds = array<i64: 1, 32, 400>}, {pipeline_mode = #tpu.pipeline_mode<synchronous>, transform_indices = @transform_1, window_bounds = array<i64: 5, 40, 32>}, {pipeline_mode = #tpu.pipeline_mode<synchronous>, transform_indices = @transform_2, window_bounds = array<i64: 100, 40>}, {pipeline_mode = #tpu.pipeline_mode<synchronous>, transform_indices = @transform_3, window_bounds = array<i64: 48, 1>}, {pipeline_mode = #tpu.pipeline_mode<synchronous>, transform_indices = @transform_4, window_bounds = array<i64: 361, 59>}, {pipeline_mode = #tpu.pipeline_mode<synchronous>, transform_indices = @transform_5, window_bounds = array<i64: 40, 6>}, {transform_indices = @transform_6, window_bounds = array<i64: 1, 5, 6>}]} {
    %c0 = arith.constant 0 : index
    %c0_0 = arith.constant 0 : index
    %c0_1 = arith.constant 0 : index
    %0 = vector.load %arg2[%c0, %c0_0, %c0_1] : memref<5x40x32xf32, #tpu.memory_space<vmem>>, vector<1x40x32xf32>
    %1 = vector.shape_cast %0 : vector<1x40x32xf32> to vector<40x32xf32>
    %c0_2 = arith.constant 0 : index
    %c0_3 = arith.constant 0 : index
    %c0_4 = arith.constant 0 : index
    %2 = vector.load %arg1[%c0_2, %c0_3, %c0_4] : memref<1x32x400xf32, #tpu.memory_space<vmem>>, vector<1x32x361xf32>
    %3 = vector.shape_cast %2 : vector<1x32x361xf32> to vector<32x361xf32>
    %cst = arith.constant dense<0.000000e+00> : vector<40x361xf32>
    %4 = tpu.matmul %1, %3, %cst {dimension_numbers = #tpu.dot_dimension_numbers<[1], [0], [0], [1], [0, 0, 1, 1], [], []>} : vector<40x32xf32>, vector<32x361xf32>, vector<40x361xf32> -> vector<40x361xf32>
    %c1 = arith.constant 1 : index
    %c0_5 = arith.constant 0 : index
    %c0_6 = arith.constant 0 : index
    %5 = vector.load %arg2[%c1, %c0_5, %c0_6] : memref<5x40x32xf32, #tpu.memory_space<vmem>>, vector<1x40x32xf32>
    %6 = vector.shape_cast %5 : vector<1x40x32xf32> to vector<40x32xf32>
    %c0_7 = arith.constant 0 : index
    %c0_8 = arith.constant 0 : index
    %c8 = arith.constant 8 : index
    %7 = vector.load %arg1[%c0_7, %c0_8, %c8] : memref<1x32x400xf32, #tpu.memory_space<vmem>>, vector<1x32x361xf32>
    %8 = vector.shape_cast %7 : vector<1x32x361xf32> to vector<32x361xf32>
    %cst_9 = arith.constant dense<0.000000e+00> : vector<40x361xf32>
    %9 = tpu.matmul %6, %8, %cst_9 {dimension_numbers = #tpu.dot_dimension_numbers<[1], [0], [0], [1], [0, 0, 1, 1], [], []>} : vector<40x32xf32>, vector<32x361xf32>, vector<40x361xf32> -> vector<40x361xf32>
    %10 = arith.addf %4, %9 : vector<40x361xf32>
    %c2 = arith.constant 2 : index
    %c0_10 = arith.constant 0 : index
    %c0_11 = arith.constant 0 : index
    %11 = vector.load %arg2[%c2, %c0_10, %c0_11] : memref<5x40x32xf32, #tpu.memory_space<vmem>>, vector<1x40x32xf32>
    %12 = vector.shape_cast %11 : vector<1x40x32xf32> to vector<40x32xf32>
    %c0_12 = arith.constant 0 : index
    %c0_13 = arith.constant 0 : index
    %c16 = arith.constant 16 : index
    %13 = vector.load %arg1[%c0_12, %c0_13, %c16] : memref<1x32x400xf32, #tpu.memory_space<vmem>>, vector<1x32x361xf32>
    %14 = vector.shape_cast %13 : vector<1x32x361xf32> to vector<32x361xf32>
    %cst_14 = arith.constant dense<0.000000e+00> : vector<40x361xf32>
    %15 = tpu.matmul %12, %14, %cst_14 {dimension_numbers = #tpu.dot_dimension_numbers<[1], [0], [0], [1], [0, 0, 1, 1], [], []>} : vector<40x32xf32>, vector<32x361xf32>, vector<40x361xf32> -> vector<40x361xf32>
    %16 = arith.addf %10, %15 : vector<40x361xf32>
    %c3 = arith.constant 3 : index
    %c0_15 = arith.constant 0 : index
    %c0_16 = arith.constant 0 : index
    %17 = vector.load %arg2[%c3, %c0_15, %c0_16] : memref<5x40x32xf32, #tpu.memory_space<vmem>>, vector<1x40x32xf32>
    %18 = vector.shape_cast %17 : vector<1x40x32xf32> to vector<40x32xf32>
    %c0_17 = arith.constant 0 : index
    %c0_18 = arith.constant 0 : index
    %c24 = arith.constant 24 : index
    %19 = vector.load %arg1[%c0_17, %c0_18, %c24] : memref<1x32x400xf32, #tpu.memory_space<vmem>>, vector<1x32x361xf32>
    %20 = vector.shape_cast %19 : vector<1x32x361xf32> to vector<32x361xf32>
    %cst_19 = arith.constant dense<0.000000e+00> : vector<40x361xf32>
    %21 = tpu.matmul %18, %20, %cst_19 {dimension_numbers = #tpu.dot_dimension_numbers<[1], [0], [0], [1], [0, 0, 1, 1], [], []>} : vector<40x32xf32>, vector<32x361xf32>, vector<40x361xf32> -> vector<40x361xf32>
    %22 = arith.addf %16, %21 : vector<40x361xf32>
    %c4 = arith.constant 4 : index
    %c0_20 = arith.constant 0 : index
    %c0_21 = arith.constant 0 : index
    %23 = vector.load %arg2[%c4, %c0_20, %c0_21] : memref<5x40x32xf32, #tpu.memory_space<vmem>>, vector<1x40x32xf32>
    %24 = vector.shape_cast %23 : vector<1x40x32xf32> to vector<40x32xf32>
    %c0_22 = arith.constant 0 : index
    %c0_23 = arith.constant 0 : index
    %c32 = arith.constant 32 : index
    %25 = vector.load %arg1[%c0_22, %c0_23, %c32] : memref<1x32x400xf32, #tpu.memory_space<vmem>>, vector<1x32x361xf32>
    %26 = vector.shape_cast %25 : vector<1x32x361xf32> to vector<32x361xf32>
    %cst_24 = arith.constant dense<0.000000e+00> : vector<40x361xf32>
    %27 = tpu.matmul %24, %26, %cst_24 {dimension_numbers = #tpu.dot_dimension_numbers<[1], [0], [0], [1], [0, 0, 1, 1], [], []>} : vector<40x32xf32>, vector<32x361xf32>, vector<40x361xf32> -> vector<40x361xf32>
    %28 = arith.addf %22, %27 : vector<40x361xf32>
    %c0_25 = arith.constant 0 : index
    %c0_26 = arith.constant 0 : index
    %29 = vector.load %arg4[%c0_25, %c0_26] : memref<48x1xf32, #tpu.memory_space<vmem>>, vector<40x1xf32>
    %30 = vector.broadcast %29 : vector<40x1xf32> to vector<40x361xf32>
    %31 = arith.addf %28, %30 : vector<40x361xf32>
    %cst_27 = arith.constant 0.000000e+00 : f32
    %32 = vector.broadcast %cst_27 : f32 to vector<40x361xf32>
    %33 = arith.cmpf ogt, %31, %32 : vector<40x361xf32>
    %cst_28 = arith.constant 0.000000e+00 : f32
    %34 = vector.broadcast %cst_28 : f32 to vector<40x361xf32>
    %35 = arith.minimumf %31, %34 : vector<40x361xf32>
    %36 = math.exp %35 : vector<40x361xf32>
    %cst_29 = arith.constant 1.000000e+00 : f32
    %37 = vector.broadcast %cst_29 : f32 to vector<40x361xf32>
    %38 = arith.subf %36, %37 : vector<40x361xf32>
    %39 = arith.select %33, %31, %38 : vector<40x361xi1>, vector<40x361xf32>
    %c0_30 = arith.constant 0 : index
    %c0_31 = arith.constant 0 : index
    %40 = vector.load %arg5[%c0_30, %c0_31] : memref<361x59xf32, #tpu.memory_space<vmem>>, vector<361x59xf32>
    %cst_32 = arith.constant dense<0.000000e+00> : vector<40x59xf32>
    %41 = tpu.matmul %39, %40, %cst_32 {dimension_numbers = #tpu.dot_dimension_numbers<[1], [0], [0], [1], [0, 0, 1, 1], [], []>} : vector<40x361xf32>, vector<361x59xf32>, vector<40x59xf32> -> vector<40x59xf32>
    %c0_33 = arith.constant 0 : index
    %c0_34 = arith.constant 0 : index
    %42 = vector.load %arg3[%c0_33, %c0_34] : memref<100x40xf32, #tpu.memory_space<vmem>>, vector<100x40xf32>
    %cst_35 = arith.constant dense<0.000000e+00> : vector<100x59xf32>
    %43 = tpu.matmul %42, %41, %cst_35 {dimension_numbers = #tpu.dot_dimension_numbers<[1], [0], [0], [1], [0, 0, 1, 1], [], []>} : vector<100x40xf32>, vector<40x59xf32>, vector<100x59xf32> -> vector<100x59xf32>
    %44 = vector.extract_strided_slice %43 {offsets = [0, 0], sizes = [5, 40], strides = [1, 1]} : vector<100x59xf32> to vector<5x40xf32>
    %45 = vector.extract_strided_slice %43 {offsets = [5, 1], sizes = [5, 40], strides = [1, 1]} : vector<100x59xf32> to vector<5x40xf32>
    %46 = arith.addf %44, %45 : vector<5x40xf32>
    %47 = vector.extract_strided_slice %43 {offsets = [10, 2], sizes = [5, 40], strides = [1, 1]} : vector<100x59xf32> to vector<5x40xf32>
    %48 = arith.addf %46, %47 : vector<5x40xf32>
    %49 = vector.extract_strided_slice %43 {offsets = [15, 3], sizes = [5, 40], strides = [1, 1]} : vector<100x59xf32> to vector<5x40xf32>
    %50 = arith.addf %48, %49 : vector<5x40xf32>
    %51 = vector.extract_strided_slice %43 {offsets = [20, 4], sizes = [5, 40], strides = [1, 1]} : vector<100x59xf32> to vector<5x40xf32>
    %52 = arith.addf %50, %51 : vector<5x40xf32>
    %53 = vector.extract_strided_slice %43 {offsets = [25, 5], sizes = [5, 40], strides = [1, 1]} : vector<100x59xf32> to vector<5x40xf32>
    %54 = arith.addf %52, %53 : vector<5x40xf32>
    %55 = vector.extract_strided_slice %43 {offsets = [30, 6], sizes = [5, 40], strides = [1, 1]} : vector<100x59xf32> to vector<5x40xf32>
    %56 = arith.addf %54, %55 : vector<5x40xf32>
    %57 = vector.extract_strided_slice %43 {offsets = [35, 7], sizes = [5, 40], strides = [1, 1]} : vector<100x59xf32> to vector<5x40xf32>
    %58 = arith.addf %56, %57 : vector<5x40xf32>
    %59 = vector.extract_strided_slice %43 {offsets = [40, 8], sizes = [5, 40], strides = [1, 1]} : vector<100x59xf32> to vector<5x40xf32>
    %60 = arith.addf %58, %59 : vector<5x40xf32>
    %61 = vector.extract_strided_slice %43 {offsets = [45, 9], sizes = [5, 40], strides = [1, 1]} : vector<100x59xf32> to vector<5x40xf32>
    %62 = arith.addf %60, %61 : vector<5x40xf32>
    %63 = vector.extract_strided_slice %43 {offsets = [50, 10], sizes = [5, 40], strides = [1, 1]} : vector<100x59xf32> to vector<5x40xf32>
    %64 = arith.addf %62, %63 : vector<5x40xf32>
    %65 = vector.extract_strided_slice %43 {offsets = [55, 11], sizes = [5, 40], strides = [1, 1]} : vector<100x59xf32> to vector<5x40xf32>
    %66 = arith.addf %64, %65 : vector<5x40xf32>
    %67 = vector.extract_strided_slice %43 {offsets = [60, 12], sizes = [5, 40], strides = [1, 1]} : vector<100x59xf32> to vector<5x40xf32>
    %68 = arith.addf %66, %67 : vector<5x40xf32>
    %69 = vector.extract_strided_slice %43 {offsets = [65, 13], sizes = [5, 40], strides = [1, 1]} : vector<100x59xf32> to vector<5x40xf32>
    %70 = arith.addf %68, %69 : vector<5x40xf32>
    %71 = vector.extract_strided_slice %43 {offsets = [70, 14], sizes = [5, 40], strides = [1, 1]} : vector<100x59xf32> to vector<5x40xf32>
    %72 = arith.addf %70, %71 : vector<5x40xf32>
    %73 = vector.extract_strided_slice %43 {offsets = [75, 15], sizes = [5, 40], strides = [1, 1]} : vector<100x59xf32> to vector<5x40xf32>
    %74 = arith.addf %72, %73 : vector<5x40xf32>
    %75 = vector.extract_strided_slice %43 {offsets = [80, 16], sizes = [5, 40], strides = [1, 1]} : vector<100x59xf32> to vector<5x40xf32>
    %76 = arith.addf %74, %75 : vector<5x40xf32>
    %77 = vector.extract_strided_slice %43 {offsets = [85, 17], sizes = [5, 40], strides = [1, 1]} : vector<100x59xf32> to vector<5x40xf32>
    %78 = arith.addf %76, %77 : vector<5x40xf32>
    %79 = vector.extract_strided_slice %43 {offsets = [90, 18], sizes = [5, 40], strides = [1, 1]} : vector<100x59xf32> to vector<5x40xf32>
    %80 = arith.addf %78, %79 : vector<5x40xf32>
    %81 = vector.extract_strided_slice %43 {offsets = [95, 19], sizes = [5, 40], strides = [1, 1]} : vector<100x59xf32> to vector<5x40xf32>
    %82 = arith.addf %80, %81 : vector<5x40xf32>
    %c40 = arith.constant 40 : index
    %c0_36 = arith.constant 0 : index
    %83 = vector.load %arg4[%c40, %c0_36] : memref<48x1xf32, #tpu.memory_space<vmem>>, vector<5x1xf32>
    %84 = vector.broadcast %83 : vector<5x1xf32> to vector<5x40xf32>
    %85 = arith.addf %82, %84 : vector<5x40xf32>
    %cst_37 = arith.constant 0.000000e+00 : f32
    %86 = vector.broadcast %cst_37 : f32 to vector<5x40xf32>
    %87 = arith.cmpf ogt, %85, %86 : vector<5x40xf32>
    %cst_38 = arith.constant 0.000000e+00 : f32
    %88 = vector.broadcast %cst_38 : f32 to vector<5x40xf32>
    %89 = arith.minimumf %85, %88 : vector<5x40xf32>
    %90 = math.exp %89 : vector<5x40xf32>
    %cst_39 = arith.constant 1.000000e+00 : f32
    %91 = vector.broadcast %cst_39 : f32 to vector<5x40xf32>
    %92 = arith.subf %90, %91 : vector<5x40xf32>
    %93 = arith.select %87, %85, %92 : vector<5x40xi1>, vector<5x40xf32>
    %c0_40 = arith.constant 0 : index
    %c0_41 = arith.constant 0 : index
    %94 = vector.load %arg6[%c0_40, %c0_41] : memref<40x6xf32, #tpu.memory_space<vmem>>, vector<40x6xf32>
    %cst_42 = arith.constant dense<0.000000e+00> : vector<5x6xf32>
    %95 = tpu.matmul %93, %94, %cst_42 {dimension_numbers = #tpu.dot_dimension_numbers<[1], [0], [0], [1], [0, 0, 1, 1], [], []>} : vector<5x40xf32>, vector<40x6xf32>, vector<5x6xf32> -> vector<5x6xf32>
    %c0_43 = arith.constant 0 : index
    %c0_44 = arith.constant 0 : index
    %c0_45 = arith.constant 0 : index
    %96 = vector.load %arg7[%c0_43, %c0_44, %c0_45] : memref<1x5x6xf32, #tpu.memory_space<vmem>>, vector<1x5x6xf32>
    %97 = vector.shape_cast %96 : vector<1x5x6xf32> to vector<5x6xf32>
    %98 = vector.shape_cast %95 : vector<5x6xf32> to vector<1x5x6xf32>
    tpu.vector_store %arg7[%c0_43, %c0_44, %c0_45], %98 {strides = array<i32>} : memref<1x5x6xf32, #tpu.memory_space<vmem>>, vector<1x5x6xf32>,
    return
  }
  func.func @transform_0(%arg0: i32) -> (i32, i32, i32) {
    %c0_i32 = arith.constant 0 : i32
    %c0_i32_0 = arith.constant 0 : i32
    %c0_i32_1 = arith.constant 0 : i32
    return %arg0, %c0_i32, %c0_i32_0 : i32, i32, i32
  }
  func.func @transform_1(%arg0: i32) -> (i32, i32, i32) {
    %c0_i32 = arith.constant 0 : i32
    %c0_i32_0 = arith.constant 0 : i32
    %c0_i32_1 = arith.constant 0 : i32
    %c0_i32_2 = arith.constant 0 : i32
    return %c0_i32, %c0_i32_0, %c0_i32_1 : i32, i32, i32
  }
  func.func @transform_2(%arg0: i32) -> (i32, i32) {
    %c0_i32 = arith.constant 0 : i32
    %c0_i32_0 = arith.constant 0 : i32
    %c0_i32_1 = arith.constant 0 : i32
    return %c0_i32, %c0_i32_0 : i32, i32
  }
  func.func @transform_3(%arg0: i32) -> (i32, i32) {
    %c0_i32 = arith.constant 0 : i32
    %c0_i32_0 = arith.constant 0 : i32
    %c0_i32_1 = arith.constant 0 : i32
    return %c0_i32, %c0_i32_0 : i32, i32
  }
  func.func @transform_4(%arg0: i32) -> (i32, i32) {
    %c0_i32 = arith.constant 0 : i32
    %c0_i32_0 = arith.constant 0 : i32
    %c0_i32_1 = arith.constant 0 : i32
    return %c0_i32, %c0_i32_0 : i32, i32
  }
  func.func @transform_5(%arg0: i32) -> (i32, i32) {
    %c0_i32 = arith.constant 0 : i32
    %c0_i32_0 = arith.constant 0 : i32
    %c0_i32_1 = arith.constant 0 : i32
    return %c0_i32, %c0_i32_0 : i32, i32
  }
  func.func @transform_6(%arg0: i32) -> (i32, i32, i32) {
    %c0_i32 = arith.constant 0 : i32
    %c0_i32_0 = arith.constant 0 : i32
    %c0_i32_1 = arith.constant 0 : i32
    return %arg0, %c0_i32, %c0_i32_0 : i32, i32, i32
  }
}

</mosaic_0001>

<llo_original>
// kernel: backbone_forward.1
$region0: #{backbone_forward.1}
  #allocation0 [shape = 'u32[]', space=smem, size = 0x4, offset = 0x4, fixed_abs, tag = 'smem constant byte address 0x4 - core index']
  #allocation1 [shape = 'u32[144,128]{1,0:T(1,128)}', space=vmem, size = 0x12000, scoped, tag = 'internal scratch']
  %s0 = inlined_call_operand.vmem [shape: f32[2,32,400], index: 0, kind: input, shape index: {}]
  %s1 = inlined_call_operand.vmem [shape: f32[5,40,32], index: 1, kind: input, shape index: {}]
  %s2 = inlined_call_operand.vmem [shape: f32[100,40], index: 2, kind: input, shape index: {}]
  %s3 = inlined_call_operand.vmem [shape: f32[48,1], index: 3, kind: input, shape index: {}]
  %s4 = inlined_call_operand.vmem [shape: f32[361,59], index: 4, kind: input, shape index: {}]
  %s5 = inlined_call_operand.vmem [shape: f32[40,6], index: 5, kind: input, shape index: {}]
  %s6 = inlined_call_operand.vmem [shape: f32[2,5,6], index: 6, kind: output, shape index: {}]
  %s7 = sld [smem:[#allocation0]]
  $region57: #{backbone_forward.1} parent=0
    _
  %s9 = ssub.s32 1, %s7
  %s10 = scalar_select 0, %s9, %s7
  loop: start=0, step=1, limit=4
  $region2: #{backbone_forward.1} parent=0 // loop_pre_header
    _
  $region3: #{backbone_forward.1} parent=0 // loop_header
    %s12 = sphi 0, %s16
    %p13 = scmp.ge.s32.totalorder %s12, 4
    %s22 = sphi 0, %s24
    %s25 = sphi 0, %s22
    %s26 = sphi 0, %s25
    %s42 = sphi 0, %s26
    %s46 = sphi 0, %s46
    %s48 = sphi 0, %s46
    %s49 = sphi 0, %s48
    %s63 = sphi 0, %s49
    %s67 = sphi 0, %s67
    %s69 = sphi 0, %s67
    %s70 = sphi 0, %s69
    %s84 = sphi 0, %s70
    %s88 = sphi 0, %s88
    %s90 = sphi 0, %s88
    %s91 = sphi 0, %s90
    %s105 = sphi 0, %s91
    %s109 = sphi 0, %s109
    %s111 = sphi 0, %s109
    %s112 = sphi 0, %s111
    %s126 = sphi 0, %s112
    %s130 = sphi 0, %s130
    %s132 = sphi 0, %s130
    %s133 = sphi 0, %s132
    %s147 = sphi 0, %s133
    %s153 = sphi 0, %s155
    %s156 = sphi 0, %s153
    %s157 = sphi 0, %s156
    %s173 = sphi 0, %s157
  $region4: #{backbone_forward.1} parent=0 // loop_header_branch
    %15 = sbr.rel (%p13) target = $region8
  $region5: #{backbone_forward.1} parent=0 // loop_body
    %s17 = ssub.s32 %s12, 1
    %s18 = ssub.s32 %s12, 2
    %s19 = sadd.s32 %s12, 1
    %s20 = ssub.s32 %s12, %s19
    %p21 = scmp.eq.s32.totalorder %s20, 0
    %s23 = sadd.s32 %s22, 1
    %s24 = scalar_select %p21, %s22, %s23
    %p27 = pneg %p21
    %p28 = scmp.eq.s32.totalorder %s12, 1
    %p29 = por %p27, %p28
    %p30 = scmp.ne.s32.totalorder %s22, %s25
    %p31 = scmp.eq.s32.totalorder %s12, 0
    %p32 = por %p30, %p31
    %p33 = scmp.ne.s32.totalorder %s22, %s25
    %p34 = scmp.eq.s32.totalorder %s17, 1
    %p35 = por %p33, %p34
    %p36 = scmp.ne.s32.totalorder %s25, %s26
    %p37 = scmp.eq.s32.totalorder %s17, 0
    %p38 = por %p36, %p37
    %p39 = scmp.ne.s32.totalorder %s25, %s26
    %p40 = scmp.eq.s32.totalorder %s18, 1
    %p41 = por %p39, %p40
    %p43 = scmp.ne.s32.totalorder %s26, %s42
    %p44 = scmp.eq.s32.totalorder %s18, 0
    %p45 = por %p43, %p44
    %s47 = sadd.s32 %s46, 1
    %p50 = scmp.eq.s32.totalorder %s12, 1
    %p51 = scmp.ne.s32.totalorder %s46, %s48
    %p52 = scmp.eq.s32.totalorder %s12, 0
    %p53 = por %p51, %p52
    %p54 = scmp.ne.s32.totalorder %s46, %s48
    %p55 = scmp.eq.s32.totalorder %s17, 1
    %p56 = por %p54, %p55
    %p57 = scmp.ne.s32.totalorder %s48, %s49
    %p58 = scmp.eq.s32.totalorder %s17, 0
    %p59 = por %p57, %p58
    %p60 = scmp.ne.s32.totalorder %s48, %s49
    %p61 = scmp.eq.s32.totalorder %s18, 1
    %p62 = por %p60, %p61
    %p64 = scmp.ne.s32.totalorder %s49, %s63
    %p65 = scmp.eq.s32.totalorder %s18, 0
    %p66 = por %p64, %p65
    %s68 = sadd.s32 %s67, 1
    %p71 = scmp.eq.s32.totalorder %s12, 1
    %p72 = scmp.ne.s32.totalorder %s67, %s69
    %p73 = scmp.eq.s32.totalorder %s12, 0
    %p74 = por %p72, %p73
    %p75 = scmp.ne.s32.totalorder %s67, %s69
    %p76 = scmp.eq.s32.totalorder %s17, 1
    %p77 = por %p75, %p76
    %p78 = scmp.ne.s32.totalorder %s69, %s70
    %p79 = scmp.eq.s32.totalorder %s17, 0
    %p80 = por %p78, %p79
    %p81 = scmp.ne.s32.totalorder %s69, %s70
    %p82 = scmp.eq.s32.totalorder %s18, 1
    %p83 = por %p81, %p82
    %p85 = scmp.ne.s32.totalorder %s70, %s84
    %p86 = scmp.eq.s32.totalorder %s18, 0
    %p87 = por %p85, %p86
    %s89 = sadd.s32 %s88, 1
    %p92 = scmp.eq.s32.totalorder %s12, 1
    %p93 = scmp.ne.s32.totalorder %s88, %s90
    %p94 = scmp.eq.s32.totalorder %s12, 0
    %p95 = por %p93, %p94
    %p96 = scmp.ne.s32.totalorder %s88, %s90
    %p97 = scmp.eq.s32.totalorder %s17, 1
    %p98 = por %p96, %p97
    %p99 = scmp.ne.s32.totalorder %s90, %s91
    %p100 = scmp.eq.s32.totalorder %s17, 0
    %p101 = por %p99, %p100
    %p102 = scmp.ne.s32.totalorder %s90, %s91
    %p103 = scmp.eq.s32.totalorder %s18, 1
    %p104 = por %p102, %p103
    %p106 = scmp.ne.s32.totalorder %s91, %s105
    %p107 = scmp.eq.s32.totalorder %s18, 0
    %p108 = por %p106, %p107
    %s110 = sadd.s32 %s109, 1
    %p113 = scmp.eq.s32.totalorder %s12, 1
    %p114 = scmp.ne.s32.totalorder %s109, %s111
    %p115 = scmp.eq.s32.totalorder %s12, 0
    %p116 = por %p114, %p115
    %p117 = scmp.ne.s32.totalorder %s109, %s111
    %p118 = scmp.eq.s32.totalorder %s17, 1
    %p119 = por %p117, %p118
    %p120 = scmp.ne.s32.totalorder %s111, %s112
    %p121 = scmp.eq.s32.totalorder %s17, 0
    %p122 = por %p120, %p121
    %p123 = scmp.ne.s32.totalorder %s111, %s112
    %p124 = scmp.eq.s32.totalorder %s18, 1
    %p125 = por %p123, %p124
    %p127 = scmp.ne.s32.totalorder %s112, %s126
    %p128 = scmp.eq.s32.totalorder %s18, 0
    %p129 = por %p127, %p128
    %s131 = sadd.s32 %s130, 1
    %p134 = scmp.eq.s32.totalorder %s12, 1
    %p135 = scmp.ne.s32.totalorder %s130, %s132
    %p136 = scmp.eq.s32.totalorder %s12, 0
    %p137 = por %p135, %p136
    %p138 = scmp.ne.s32.totalorder %s130, %s132
    %p139 = scmp.eq.s32.totalorder %s17, 1
    %p140 = por %p138, %p139
    %p141 = scmp.ne.s32.totalorder %s132, %s133
    %p142 = scmp.eq.s32.totalorder %s17, 0
    %p143 = por %p141, %p142
    %p144 = scmp.ne.s32.totalorder %s132, %s133
    %p145 = scmp.eq.s32.totalorder %s18, 1
    %p146 = por %p144, %p145
    %p148 = scmp.ne.s32.totalorder %s133, %s147
    %p149 = scmp.eq.s32.totalorder %s18, 0
    %p150 = por %p148, %p149
    %s151 = ssub.s32 %s12, %s19
    %p152 = scmp.eq.s32.totalorder %s151, 0
    %s154 = sadd.s32 %s153, 1
    %s155 = scalar_select %p152, %s153, %s154
    %p158 = pneg %p152
    %p159 = scmp.eq.s32.totalorder %s12, 1
    %p160 = por %p158, %p159
    %p161 = scmp.ne.s32.totalorder %s153, %s156
    %p162 = scmp.eq.s32.totalorder %s12, 0
    %p163 = por %p161, %p162
    %p164 = scmp.ne.s32.totalorder %s153, %s156
    %p165 = scmp.eq.s32.totalorder %s17, 1
    %p166 = por %p164, %p165
    %p167 = scmp.ne.s32.totalorder %s156, %s157
    %p168 = scmp.eq.s32.totalorder %s17, 0
    %p169 = por %p167, %p168
    %p170 = scmp.ne.s32.totalorder %s156, %s157
    %p171 = scmp.eq.s32.totalorder %s18, 1
    %p172 = por %p170, %p171
    %p174 = scmp.ne.s32.totalorder %s157, %s173
    %p175 = scmp.eq.s32.totalorder %s18, 0
    %p176 = por %p174, %p175
    %p177 = scmp.le.s32.totalorder 1, %s12
    %p178 = scmp.lt.s32.totalorder %s12, 3
    %p179 = pnand %p177, %p178
    %p180 = pneg %p179
    // Predicated region
    $region9: #{backbone_forward.1} parent=5 // pred_check
      _
    $region10: #{backbone_forward.1} parent=5 // pred_check_branch
      %182 = sbr.rel (%p179) target = $region12
    $region11: #{backbone_forward.1} parent=5 // pred_region
      %s183 = ssub.s32 %s12, 1
      // Predicated region
      $region13: #{backbone_forward.1} parent=11 // pred_check
        %p184 = pneg %p59
      $region14: #{backbone_forward.1} parent=11 // pred_check_branch
        %186 = sbr.rel (%p184) target = $region16
      $region15: #{backbone_forward.1} parent=11 // pred_region
        _
      $region16: #{backbone_forward.1} parent=11 // pred_fallthru
        _
      // Predicated region
      $region17: #{backbone_forward.1} parent=11 // pred_check
        %p187 = pneg %p80
      $region18: #{backbone_forward.1} parent=11 // pred_check_branch
        %189 = sbr.rel (%p187) target = $region20
      $region19: #{backbone_forward.1} parent=11 // pred_region
        _
      $region20: #{backbone_forward.1} parent=11 // pred_fallthru
        _
      // Predicated region
      $region21: #{backbone_forward.1} parent=11 // pred_check
        %p190 = pneg %p101
      $region22: #{backbone_forward.1} parent=11 // pred_check_branch
        %192 = sbr.rel (%p190) target = $region24
      $region23: #{backbone_forward.1} parent=11 // pred_region
        _
      $region24: #{backbone_forward.1} parent=11 // pred_fallthru
        _
      // Predicated region
      $region25: #{backbone_forward.1} parent=11 // pred_check
        %p193 = pneg %p122
      $region26: #{backbone_forward.1} parent=11 // pred_check_branch
        %195 = sbr.rel (%p193) target = $region28
      $region27: #{backbone_forward.1} parent=11 // pred_region
        _
      $region28: #{backbone_forward.1} parent=11 // pred_fallthru
        _
      // Predicated region
      $region29: #{backbone_forward.1} parent=11 // pred_check
        %p196 = pneg %p143
      $region30: #{backbone_forward.1} parent=11 // pred_check_branch
        %198 = sbr.rel (%p196) target = $region32
      $region31: #{backbone_forward.1} parent=11 // pred_region
        _
      $region32: #{backbone_forward.1} parent=11 // pred_fallthru
        _
    $region12: #{backbone_forward.1} parent=5 // pred_fallthru
      _
    %p199 = scmp.lt.s32.totalorder %s12, 2
    // Predicated region
    $region33: #{backbone_forward.1} parent=5 // pred_check
      %p200 = pneg %p199
    $region34: #{backbone_forward.1} parent=5 // pred_check_branch
      %202 = sbr.rel (%p200) target = $region36
    $region35: #{backbone_forward.1} parent=5 // pred_region
      // Predicated region
      $region37: #{backbone_forward.1} parent=35 // pred_check
        %p203 = pneg %p32
      $region38: #{backbone_forward.1} parent=35 // pred_check_branch
        %205 = sbr.rel (%p203) target = $region40
      $region39: #{backbone_forward.1} parent=35 // pred_region
        %p206 = scmp.lt.s32.totalorder %s12, 1
        %s207 = scalar_select %p206, %s12, 1
        %s208 = smul.addr %s207, 16
        %s209 = smul.addr %s208, 8
        %s210 = scalar_lea.vmem %s0, %s209
      $region40: #{backbone_forward.1} parent=35 // pred_fallthru
        _
    $region36: #{backbone_forward.1} parent=5 // pred_fallthru
      _
    %p211 = scmp.le.s32.totalorder 1, %s12
    %p212 = scmp.lt.s32.totalorder %s12, 3
    %p213 = pnand %p211, %p212
    %p214 = pneg %p213
    // Predicated region
    $region41: #{backbone_forward.1} parent=5 // pred_check
      _
    $region42: #{backbone_forward.1} parent=5 // pred_check_branch
      %216 = sbr.rel (%p213) target = $region44
    $region43: #{backbone_forward.1} parent=5 // pred_region
      %s217 = ssub.s32 %s12, 1
      %p218 = scmp.lt.s32.totalorder %s17, 1
      %s219 = scalar_select %p218, %s17, 1
      %s220 = smul.addr %s219, 16
      %s221 = smul.addr %s220, 8
      %s222 = scalar_lea.vmem %s0, %s221
      %p223 = pneg %p38
      %p224 = pneg %p35
      %p225 = pneg %p59
      %p226 = pneg %p56
      %p227 = pneg %p80
      %p228 = pneg %p77
      %p229 = pneg %p101
      %p230 = pneg %p98
      %p231 = pneg %p122
      %p232 = pneg %p119
      %p233 = pneg %p143
      %p234 = pneg %p140
      %p235 = pneg %p169
      %p236 = pneg %p166
      %p237 = scmp.lt.s32.totalorder %s17, 1
      %s238 = scalar_select %p237, %s17, 1
      %s239 = smul.addr %s238, 8
      %s240 = scalar_lea.vmem %s6, %s239
      %p241 = scmp.lt.s32.totalorder %s17, 1
      %s242 = scalar_select %p241, %s17, 1
      %s243 = smul.addr %s242, 16
      %s244 = smul.addr %s243, 8
      %s245 = scalar_lea.vmem %s0, %s244
      %p246 = scmp.lt.s32.totalorder %s17, 1
      %s247 = scalar_select %p246, %s17, 1
      %s248 = smul.addr %s247, 8
      %s249 = scalar_lea.vmem %s6, %s248
      %v250 = vld [vmem:[%s1] sm:$0xff]
      %v251 = vld [vmem:[%s1 + $0x8] sm:$0xff]
      %v252 = vld [vmem:[%s1 + $0x10] sm:$0xff]
      %v253 = vld [vmem:[%s1 + $0x18] sm:$0xff]
      %v254 = vld [vmem:[%s1 + $0x20] sm:$0xff]
      %v255 = vld [vmem:[%s245] sm:$0xff]
      %v256 = vld [vmem:[%s245 + $0x8] sm:$0xff]
      %v257 = vld [vmem:[%s245 + $0x10] sm:$0xff]
      %v258 = vld [vmem:[%s245 + $0x20] sm:$0xff]
      %v259 = vld [vmem:[%s245 + $0x28] sm:$0xff]
      %v260 = vld [vmem:[%s245 + $0x30] sm:$0xff]
      %v261 = vld [vmem:[%s245 + $0x40] sm:$0xff]
      %v262 = vld [vmem:[%s245 + $0x48] sm:$0xff]
      %v263 = vld [vmem:[%s245 + $0x50] sm:$0xff]
      %v264 = vld [vmem:[%s245 + $0x60] sm:$0xff]
      %v265 = vld [vmem:[%s245 + $0x68] sm:$0xff]
      %v266 = vld [vmem:[%s245 + $0x70] sm:$0xff]
      %s267 = scalar_lea.vmem %s1, 40
      %v268 = vld [vmem:[%s267] sm:$0xff]
      %v269 = vld [vmem:[%s267 + $0x8] sm:$0xff]
      %v270 = vld [vmem:[%s267 + $0x10] sm:$0xff]
      %v271 = vld [vmem:[%s267 + $0x18] sm:$0xff]
      %v272 = vld [vmem:[%s267 + $0x20] sm:$0xff]
      %285 = vrot.lane.b32.xlu0 %v255, 120
      %v286 = vpop.permute.xlu0 %285
      %287 = vrot.lane.b32.xlu0 %v256, 120
      %v288 = vpop.permute.xlu0 %287
      %289 = vrot.lane.b32.xlu0 %v257, 120
      %v290 = vpop.permute.xlu0 %289
      %291 = vrot.lane.b32.xlu0 %v258, 120
      %v292 = vpop.permute.xlu0 %291
      %293 = vrot.lane.b32.xlu0 %v259, 120
      %v294 = vpop.permute.xlu0 %293
      %295 = vrot.lane.b32.xlu0 %v260, 120
      %v296 = vpop.permute.xlu0 %295
      %297 = vrot.lane.b32.xlu0 %v261, 120
      %v298 = vpop.permute.xlu0 %297
      %299 = vrot.lane.b32.xlu0 %v262, 120
      %v300 = vpop.permute.xlu0 %299
      %301 = vrot.lane.b32.xlu0 %v263, 120
      %v302 = vpop.permute.xlu0 %301
      %303 = vrot.lane.b32.xlu0 %v264, 120
      %v304 = vpop.permute.xlu0 %303
      %305 = vrot.lane.b32.xlu0 %v265, 120
      %v306 = vpop.permute.xlu0 %305
      %307 = vrot.lane.b32.xlu0 %v266, 120
      %v308 = vpop.permute.xlu0 %307
      %vm309 = vcmask 982016
      %v310 = vsel %vm309, %v286, %v288
      %v311 = vsel %vm309, %v288, %v290
      %v312 = vsel %vm309, %v292, %v294
      %v313 = vsel %vm309, %v294, %v296
      %v314 = vsel %vm309, %v298, %v300
      %v315 = vsel %vm309, %v300, %v302
      %v316 = vsel %vm309, %v304, %v306
      %v317 = vsel %vm309, %v306, %v308
      %vm330 = vcmask 261120
      %v332 = vsel %vm330, %v268, 0
      %v335 = vsel %vm330, %v269, 0
      %v338 = vsel %vm330, %v270, 0
      %v341 = vsel %vm330, %v271, 0
      %v344 = vsel %vm330, %v272, 0
      %346 = vmatprep.subr.mxu0 %v311
      %347 = vmatpush1.msra.mxu0 %v310
      %348 = vmatprep.subr.mxu0 %v313
      %349 = vmatpush1.msra.mxu0 %v312
      %350 = vmatprep.subr.mxu0 %v315
      %351 = vmatpush1.msra.mxu0 %v314
      %352 = vmatprep.subr.mxu0 %v317
      %353 = vmatpush1.msra.mxu0 %v316
      %354 = vmatprep.subr.mxu0 0.0
      %355 = vmatpush1.msra.mxu0 0.0
      %356 = vmatprep.subr.mxu0 0.0
      %357 = vmatpush1.msra.mxu0 0.0
      %358 = vmatprep.subr.mxu0 0.0
      %359 = vmatpush1.msra.mxu0 0.0
      %360 = vmatprep.subr.mxu0 0.0
      %361 = vmatpush1.msra.mxu0 0.0
      %362 = vmatprep.subr.mxu0 0.0
      %363 = vmatpush1.msra.mxu0 0.0
      %364 = vmatprep.subr.mxu0 0.0
      %365 = vmatpush1.msra.mxu0 0.0
      %366 = vmatprep.subr.mxu0 0.0
      %367 = vmatpush1.msra.mxu0 0.0
      %368 = vmatprep.subr.mxu0 0.0
      %369 = vmatpush1.msra.mxu0 0.0
      %370 = vmatprep.subr.mxu0 0.0
      %371 = vmatpush1.msra.mxu0 0.0
      %372 = vmatprep.subr.mxu0 0.0
      %373 = vmatpush1.msra.mxu0 0.0
      %374 = vmatprep.subr.mxu0 0.0
      %375 = vmatpush1.msra.mxu0 0.0
      %376 = vmatprep.subr.mxu0 0.0
      %377 = vmatpush1.msra.mxu0 0.0
      %378 = vmatprep.subr.mxu0 0.0
      %379 = vmatpush1.msra.mxu0 0.0
      %380 = vmatprep.subr.mxu0 0.0
      %381 = vmatpush1.msra.mxu0 0.0
      %382 = vmatprep.subr.mxu0 0.0
      %383 = vmatpush1.msra.mxu0 0.0
      %384 = vmatprep.subr.mxu0 0.0
      %385 = vmatpush1.msra.mxu0 0.0
      %386 = vmatprep.subr.mxu0 0.0
      %387 = vmatpush1.msra.mxu0 0.0
      %388 = vmatprep.subr.mxu0 0.0
      %389 = vmatpush1.msra.mxu0 0.0
      %390 = vmatprep.subr.mxu0 0.0
      %391 = vmatpush1.msra.mxu0 0.0
      %392 = vmatprep.subr.mxu0 0.0
      %393 = vmatpush1.msra.mxu0 0.0
      %394 = vmatprep.subr.mxu0 0.0
      %395 = vmatpush1.msra.mxu0 0.0
      %396 = vmatprep.subr.mxu0 0.0
      %397 = vmatpush1.msra.mxu0 0.0
      %398 = vmatprep.subr.mxu0 0.0
      %399 = vmatpush1.msra.mxu0 0.0
      %400 = vmatprep.subr.mxu0 0.0
      %401 = vmatpush1.msra.mxu0 0.0
      %402 = vmatprep.subr.mxu0 0.0
      %403 = vmatpush1.msra.mxu0 0.0
      %404 = vmatprep.subr.mxu0 0.0
      %405 = vmatpush1.msra.mxu0 0.0
      %406 = vmatprep.subr.mxu0 0.0
      %407 = vmatpush1.msra.mxu0 0.0
      %408 = vmatprep.subr.mxu0 0.0
      %409 = vmatpush1.msra.mxu0 0.0
      %410 = vmatprep.mubr.f32.mxu0 0.0
      %411 = vmatmul.mubr.f32.gmra.mrb[0].mxu0 %v332
      %v412 = vpop.f32.mrb[0].mxu0
      %v413 = vadd.f32 0.0, %v412
      %v414 = vpop.f32.mrb[0].mxu0
      %v415 = vadd.f32 0.0, %v414
      %416 = vmatprep.mubr.f32.mxu0 0.0
      %417 = vmatmul.mubr.f32.gmra.mrb[0].mxu0 %v335
      %v418 = vpop.f32.mrb[0].mxu0
      %v419 = vadd.f32 0.0, %v418
      %v420 = vpop.f32.mrb[0].mxu0
      %v421 = vadd.f32 0.0, %v420
      %422 = vmatprep.mubr.f32.mxu0 0.0
      %423 = vmatmul.mubr.f32.gmra.mrb[0].mxu0 %v338
      %v424 = vpop.f32.mrb[0].mxu0
      %v425 = vadd.f32 0.0, %v424
      %v426 = vpop.f32.mrb[0].mxu0
      %v427 = vadd.f32 0.0, %v426
      %428 = vmatprep.mubr.f32.mxu0 0.0
      %429 = vmatmul.mubr.f32.gmra.mrb[0].mxu0 %v341
      %v430 = vpop.f32.mrb[0].mxu0
      %v431 = vadd.f32 0.0, %v430
      %v432 = vpop.f32.mrb[0].mxu0
      %v433 = vadd.f32 0.0, %v432
      %434 = vmatprep.mubr.f32.mxu0 0.0
      %435 = vmatmul.mubr.f32.gmra.mrb[0].mxu0 %v344
      %v436 = vpop.f32.mrb[0].mxu0
      %v437 = vadd.f32 0.0, %v436
      %v438 = vpop.f32.mrb[0].mxu0
      %v439 = vadd.f32 0.0, %v438
      %440 = vdwg.mxu0
      %441 = vmatprep.subr.mxu0 0.0
      %442 = vmatpush1.msra.mxu0 %v290
      %443 = vmatprep.subr.mxu0 0.0
      %444 = vmatpush1.msra.mxu0 %v296
      %445 = vmatprep.subr.mxu0 0.0
      %446 = vmatpush1.msra.mxu0 %v302
      %447 = vmatprep.subr.mxu0 0.0
      %448 = vmatpush1.msra.mxu0 %v308
      %449 = vmatprep.subr.mxu0 0.0
      %450 = vmatpush1.msra.mxu0 0.0
      %451 = vmatprep.subr.mxu0 0.0
      %452 = vmatpush1.msra.mxu0 0.0
      %453 = vmatprep.subr.mxu0 0.0
      %454 = vmatpush1.msra.mxu0 0.0
      %455 = vmatprep.subr.mxu0 0.0
      %456 = vmatpush1.msra.mxu0 0.0
      %457 = vmatprep.subr.mxu0 0.0
      %458 = vmatpush1.msra.mxu0 0.0
      %459 = vmatprep.subr.mxu0 0.0
      %460 = vmatpush1.msra.mxu0 0.0
      %461 = vmatprep.subr.mxu0 0.0
      %462 = vmatpush1.msra.mxu0 0.0
      %463 = vmatprep.subr.mxu0 0.0
      %464 = vmatpush1.msra.mxu0 0.0
      %465 = vmatprep.subr.mxu0 0.0
      %466 = vmatpush1.msra.mxu0 0.0
      %467 = vmatprep.subr.mxu0 0.0
      %468 = vmatpush1.msra.mxu0 0.0
      %469 = vmatprep.subr.mxu0 0.0
      %470 = vmatpush1.msra.mxu0 0.0
      %471 = vmatprep.subr.mxu0 0.0
      %472 = vmatpush1.msra.mxu0 0.0
      %473 = vmatprep.subr.mxu0 0.0
      %474 = vmatpush1.msra.mxu0 0.0
      %475 = vmatprep.subr.mxu0 0.0
      %476 = vmatpush1.msra.mxu0 0.0
      %477 = vmatprep.subr.mxu0 0.0
      %478 = vmatpush1.msra.mxu0 0.0
      %479 = vmatprep.subr.mxu0 0.0
      %480 = vmatpush1.msra.mxu0 0.0
      %481 = vmatprep.subr.mxu0 0.0
      %482 = vmatpush1.msra.mxu0 0.0
      %483 = vmatprep.subr.mxu0 0.0
      %484 = vmatpush1.msra.mxu0 0.0
      %485 = vmatprep.subr.mxu0 0.0
      %486 = vmatpush1.msra.mxu0 0.0
      %487 = vmatprep.subr.mxu0 0.0
      %488 = vmatpush1.msra.mxu0 0.0
      %489 = vmatprep.subr.mxu0 0.0
      %490 = vmatpush1.msra.mxu0 0.0
      %491 = vmatprep.subr.mxu0 0.0
      %492 = vmatpush1.msra.mxu0 0.0
      %493 = vmatprep.subr.mxu0 0.0
      %494 = vmatpush1.msra.mxu0 0.0
      %495 = vmatprep.subr.mxu0 0.0
      %496 = vmatpush1.msra.mxu0 0.0
      %497 = vmatprep.subr.mxu0 0.0
      %498 = vmatpush1.msra.mxu0 0.0
      %499 = vmatprep.subr.mxu0 0.0
      %500 = vmatpush1.msra.mxu0 0.0
      %501 = vmatprep.subr.mxu0 0.0
      %502 = vmatpush1.msra.mxu0 0.0
      %503 = vmatprep.subr.mxu0 0.0
      %504 = vmatpush1.msra.mxu0 0.0
      %505 = vmatprep.mubr.f32.mxu0 0.0
      %506 = vmatmul.mubr.f32.gmra.mrb[0].mxu0 %v332
      %v507 = vpop.f32.mrb[0].mxu0
      %v508 = vadd.f32 0.0, %v507
      %v509 = vpop.f32.mrb[0].mxu0
      %510 = vmatprep.mubr.f32.mxu0 0.0
      %511 = vmatmul.mubr.f32.gmra.mrb[0].mxu0 %v335
      %v512 = vpop.f32.mrb[0].mxu0
      %v513 = vadd.f32 0.0, %v512
      %v514 = vpop.f32.mrb[0].mxu0
      %515 = vmatprep.mubr.f32.mxu0 0.0
      %516 = vmatmul.mubr.f32.gmra.mrb[0].mxu0 %v338
      %v517 = vpop.f32.mrb[0].mxu0
      %v518 = vadd.f32 0.0, %v517
      %v519 = vpop.f32.mrb[0].mxu0
      %520 = vmatprep.mubr.f32.mxu0 0.0
      %521 = vmatmul.mubr.f32.gmra.mrb[0].mxu0 %v341
      %v522 = vpop.f32.mrb[0].mxu0
      %v523 = vadd.f32 0.0, %v522
      %v524 = vpop.f32.mrb[0].mxu0
      %525 = vmatprep.mubr.f32.mxu0 0.0
      %526 = vmatmul.mubr.f32.gmra.mrb[0].mxu0 %v344
      %v527 = vpop.f32.mrb[0].mxu0
      %v528 = vadd.f32 0.0, %v527
      %v529 = vpop.f32.mrb[0].mxu0
      %530 = vdwg.mxu0
      %v532 = vsel %vm330, %v250, 0
      %v535 = vsel %vm330, %v251, 0
      %v538 = vsel %vm330, %v252, 0
      %v541 = vsel %vm330, %v253, 0
      %v544 = vsel %vm330, %v254, 0
      %546 = vmatprep.subr.mxu0 %v256
      %547 = vmatpush1.msra.mxu0 %v255
      %548 = vmatprep.subr.mxu0 %v259
      %549 = vmatpush1.msra.mxu0 %v258
      %550 = vmatprep.subr.mxu0 %v262
      %551 = vmatpush1.msra.mxu0 %v261
      %552 = vmatprep.subr.mxu0 %v265
      %553 = vmatpush1.msra.mxu0 %v264
      %554 = vmatprep.subr.mxu0 0.0
      %555 = vmatpush1.msra.mxu0 0.0
      %556 = vmatprep.subr.mxu0 0.0
      %557 = vmatpush1.msra.mxu0 0.0
      %558 = vmatprep.subr.mxu0 0.0
      %559 = vmatpush1.msra.mxu0 0.0
      %560 = vmatprep.subr.mxu0 0.0
      %561 = vmatpush1.msra.mxu0 0.0
      %562 = vmatprep.subr.mxu0 0.0
      %563 = vmatpush1.msra.mxu0 0.0
      %564 = vmatprep.subr.mxu0 0.0
      %565 = vmatpush1.msra.mxu0 0.0
      %566 = vmatprep.subr.mxu0 0.0
      %567 = vmatpush1.msra.mxu0 0.0
      %568 = vmatprep.subr.mxu0 0.0
      %569 = vmatpush1.msra.mxu0 0.0
      %570 = vmatprep.subr.mxu0 0.0
      %571 = vmatpush1.msra.mxu0 0.0
      %572 = vmatprep.subr.mxu0 0.0
      %573 = vmatpush1.msra.mxu0 0.0
      %574 = vmatprep.subr.mxu0 0.0
      %575 = vmatpush1.msra.mxu0 0.0
      %576 = vmatprep.subr.mxu0 0.0
      %577 = vmatpush1.msra.mxu0 0.0
      %578 = vmatprep.subr.mxu0 0.0
      %579 = vmatpush1.msra.mxu0 0.0
      %580 = vmatprep.subr.mxu0 0.0
      %581 = vmatpush1.msra.mxu0 0.0
      %582 = vmatprep.subr.mxu0 0.0
      %583 = vmatpush1.msra.mxu0 0.0
      %584 = vmatprep.subr.mxu0 0.0
      %585 = vmatpush1.msra.mxu0 0.0
      %586 = vmatprep.subr.mxu0 0.0
      %587 = vmatpush1.msra.mxu0 0.0
      %588 = vmatprep.subr.mxu0 0.0
      %589 = vmatpush1.msra.mxu0 0.0
      %590 = vmatprep.subr.mxu0 0.0
      %591 = vmatpush1.msra.mxu0 0.0
      %592 = vmatprep.subr.mxu0 0.0
      %593 = vmatpush1.msra.mxu0 0.0
      %594 = vmatprep.subr.mxu0 0.0
      %595 = vmatpush1.msra.mxu0 0.0
      %596 = vmatprep.subr.mxu0 0.0
      %597 = vmatpush1.msra.mxu0 0.0
      %598 = vmatprep.subr.mxu0 0.0
      %599 = vmatpush1.msra.mxu0 0.0
      %600 = vmatprep.subr.mxu0 0.0
      %601 = vmatpush1.msra.mxu0 0.0
      %602 = vmatprep.subr.mxu0 0.0
      %603 = vmatpush1.msra.mxu0 0.0
      %604 = vmatprep.subr.mxu0 0.0
      %605 = vmatpush1.msra.mxu0 0.0
      %606 = vmatprep.subr.mxu0 0.0
      %607 = vmatpush1.msra.mxu0 0.0
      %608 = vmatprep.subr.mxu0 0.0
      %609 = vmatpush1.msra.mxu0 0.0
      %610 = vmatprep.mubr.f32.mxu0 0.0
      %611 = vmatmul.mubr.f32.gmra.mrb[0].mxu0 %v532
      %v612 = vpop.f32.mrb[0].mxu0
      %v613 = vadd.f32 %v413, %v612
      %v614 = vpop.f32.mrb[0].mxu0
      %v615 = vadd.f32 %v415, %v614
      %616 = vmatprep.mubr.f32.mxu0 0.0
      %617 = vmatmul.mubr.f32.gmra.mrb[0].mxu0 %v535
      %v618 = vpop.f32.mrb[0].mxu0
      %v619 = vadd.f32 %v419, %v618
      %v620 = vpop.f32.mrb[0].mxu0
      %v621 = vadd.f32 %v421, %v620
      %622 = vmatprep.mubr.f32.mxu0 0.0
      %623 = vmatmul.mubr.f32.gmra.mrb[0].mxu0 %v538
      %v624 = vpop.f32.mrb[0].mxu0
      %v625 = vadd.f32 %v425, %v624
      %v626 = vpop.f32.mrb[0].mxu0
      %v627 = vadd.f32 %v427, %v626
      %628 = vmatprep.mubr.f32.mxu0 0.0
      %629 = vmatmul.mubr.f32.gmra.mrb[0].mxu0 %v541
      %v630 = vpop.f32.mrb[0].mxu0
      %v631 = vadd.f32 %v431, %v630
      %v632 = vpop.f32.mrb[0].mxu0
      %v633 = vadd.f32 %v433, %v632
      %634 = vmatprep.mubr.f32.mxu0 0.0
      %635 = vmatmul.mubr.f32.gmra.mrb[0].mxu0 %v544
      %v636 = vpop.f32.mrb[0].mxu0
      %v637 = vadd.f32 %v437, %v636
      %v638 = vpop.f32.mrb[0].mxu0
      %v639 = vadd.f32 %v439, %v638
      %640 = vdwg.mxu0
      %641 = vmatprep.subr.mxu0 0.0
      %642 = vmatpush1.msra.mxu0 %v257
      %643 = vmatprep.subr.mxu0 0.0
      %644 = vmatpush1.msra.mxu0 %v260
      %645 = vmatprep.subr.mxu0 0.0
      %646 = vmatpush1.msra.mxu0 %v263
      %647 = vmatprep.subr.mxu0 0.0
      %648 = vmatpush1.msra.mxu0 %v266
      %649 = vmatprep.subr.mxu0 0.0
      %650 = vmatpush1.msra.mxu0 0.0
      %651 = vmatprep.subr.mxu0 0.0
      %652 = vmatpush1.msra.mxu0 0.0
      %653 = vmatprep.subr.mxu0 0.0
      %654 = vmatpush1.msra.mxu0 0.0
      %655 = vmatprep.subr.mxu0 0.0
      %656 = vmatpush1.msra.mxu0 0.0
      %657 = vmatprep.subr.mxu0 0.0
      %658 = vmatpush1.msra.mxu0 0.0
      %659 = vmatprep.subr.mxu0 0.0
      %660 = vmatpush1.msra.mxu0 0.0
      %661 = vmatprep.subr.mxu0 0.0
      %662 = vmatpush1.msra.mxu0 0.0
      %663 = vmatprep.subr.mxu0 0.0
      %664 = vmatpush1.msra.mxu0 0.0
      %665 = vmatprep.subr.mxu0 0.0
      %666 = vmatpush1.msra.mxu0 0.0
      %667 = vmatprep.subr.mxu0 0.0
      %668 = vmatpush1.msra.mxu0 0.0
      %669 = vmatprep.subr.mxu0 0.0
      %670 = vmatpush1.msra.mxu0 0.0
      %671 = vmatprep.subr.mxu0 0.0
      %672 = vmatpush1.msra.mxu0 0.0
      %673 = vmatprep.subr.mxu0 0.0
      %674 = vmatpush1.msra.mxu0 0.0
      %675 = vmatprep.subr.mxu0 0.0
      %676 = vmatpush1.msra.mxu0 0.0
      %677 = vmatprep.subr.mxu0 0.0
      %678 = vmatpush1.msra.mxu0 0.0
      %679 = vmatprep.subr.mxu0 0.0
      %680 = vmatpush1.msra.mxu0 0.0
      %681 = vmatprep.subr.mxu0 0.0
      %682 = vmatpush1.msra.mxu0 0.0
      %683 = vmatprep.subr.mxu0 0.0
      %684 = vmatpush1.msra.mxu0 0.0
      %685 = vmatprep.subr.mxu0 0.0
      %686 = vmatpush1.msra.mxu0 0.0
      %687 = vmatprep.subr.mxu0 0.0
      %688 = vmatpush1.msra.mxu0 0.0
      %689 = vmatprep.subr.mxu0 0.0
      %690 = vmatpush1.msra.mxu0 0.0
      %691 = vmatprep.subr.mxu0 0.0
      %692 = vmatpush1.msra.mxu0 0.0
      %693 = vmatprep.subr.mxu0 0.0
      %694 = vmatpush1.msra.mxu0 0.0
      %695 = vmatprep.subr.mxu0 0.0
      %696 = vmatpush1.msra.mxu0 0.0
      %697 = vmatprep.subr.mxu0 0.0
      %698 = vmatpush1.msra.mxu0 0.0
      %699 = vmatprep.subr.mxu0 0.0
      %700 = vmatpush1.msra.mxu0 0.0
      %701 = vmatprep.subr.mxu0 0.0
      %702 = vmatpush1.msra.mxu0 0.0
      %703 = vmatprep.subr.mxu0 0.0
      %704 = vmatpush1.msra.mxu0 0.0
      %705 = vmatprep.mubr.f32.mxu0 0.0
      %706 = vmatmul.mubr.f32.gmra.mrb[0].mxu0 %v532
      %v707 = vpop.f32.mrb[0].mxu0
      %v708 = vadd.f32 %v508, %v707
      %v709 = vpop.f32.mrb[0].mxu0
      %710 = vmatprep.mubr.f32.mxu0 0.0
      %711 = vmatmul.mubr.f32.gmra.mrb[0].mxu0 %v535
      %v712 = vpop.f32.mrb[0].mxu0
      %v713 = vadd.f32 %v513, %v712
      %v714 = vpop.f32.mrb[0].mxu0
      %715 = vmatprep.mubr.f32.mxu0 0.0
      %716 = vmatmul.mubr.f32.gmra.mrb[0].mxu0 %v538
      %v717 = vpop.f32.mrb[0].mxu0
      %v718 = vadd.f32 %v518, %v717
      %v719 = vpop.f32.mrb[0].mxu0
      %720 = vmatprep.mubr.f32.mxu0 0.0
      %721 = vmatmul.mubr.f32.gmra.mrb[0].mxu0 %v541
      %v722 = vpop.f32.mrb[0].mxu0
      %v723 = vadd.f32 %v523, %v722
      %v724 = vpop.f32.mrb[0].mxu0
      %725 = vmatprep.mubr.f32.mxu0 0.0
      %726 = vmatmul.mubr.f32.gmra.mrb[0].mxu0 %v544
      %v727 = vpop.f32.mrb[0].mxu0
      %v728 = vadd.f32 %v528, %v727
      %v729 = vpop.f32.mrb[0].mxu0
      %730 = vdwg.mxu0
      %s731 = scalar_lea.vmem %s1, 80
      %v732 = vld [vmem:[%s731] sm:$0xff]
      %v733 = vld [vmem:[%s731 + $0x8] sm:$0xff]
      %v734 = vld [vmem:[%s731 + $0x10] sm:$0xff]
      %v735 = vld [vmem:[%s731 + $0x18] sm:$0xff]
      %v736 = vld [vmem:[%s731 + $0x20] sm:$0xff]
      %737 = vrot.lane.b32.xlu0 %v255, 112
      %v738 = vpop.permute.xlu0 %737
      %739 = vrot.lane.b32.xlu0 %v256, 112
      %v740 = vpop.permute.xlu0 %739
      %741 = vrot.lane.b32.xlu0 %v257, 112
      %v742 = vpop.permute.xlu0 %741
      %743 = vrot.lane.b32.xlu0 %v258, 112
      %v744 = vpop.permute.xlu0 %743
      %745 = vrot.lane.b32.xlu0 %v259, 112
      %v746 = vpop.permute.xlu0 %745
      %747 = vrot.lane.b32.xlu0 %v260, 112
      %v748 = vpop.permute.xlu0 %747
      %749 = vrot.lane.b32.xlu0 %v261, 112
      %v750 = vpop.permute.xlu0 %749
      %751 = vrot.lane.b32.xlu0 %v262, 112
      %v752 = vpop.permute.xlu0 %751
      %753 = vrot.lane.b32.xlu0 %v263, 112
      %v754 = vpop.permute.xlu0 %753
      %755 = vrot.lane.b32.xlu0 %v264, 112
      %v756 = vpop.permute.xlu0 %755
      %757 = vrot.lane.b32.xlu0 %v265, 112
      %v758 = vpop.permute.xlu0 %757
      %759 = vrot.lane.b32.xlu0 %v266, 112
      %v760 = vpop.permute.xlu0 %759
      %vm761 = vcmask 916480
      %v762 = vsel %vm761, %v738, %v740
      %v763 = vsel %vm761, %v740, %v742
      %v764 = vsel %vm761, %v744, %v746
      %v765 = vsel %vm761, %v746, %v748
      %v766 = vsel %vm761, %v750, %v752
      %v767 = vsel %vm761, %v752, %v754
      %v768 = vsel %vm761, %v756, %v758
      %v769 = vsel %vm761, %v758, %v760
      %v783 = vsel %vm330, %v732, 0
      %v786 = vsel %vm330, %v733, 0
      %v789 = vsel %vm330, %v734, 0
      %v792 = vsel %vm330, %v735, 0
      %v795 = vsel %vm330, %v736, 0
      %797 = vmatprep.subr.mxu0 %v763
      %798 = vmatpush1.msra.mxu0 %v762
      %799 = vmatprep.subr.mxu0 %v765
      %800 = vmatpush1.msra.mxu0 %v764
      %801 = vmatprep.subr.mxu0 %v767
      %802 = vmatpush1.msra.mxu0 %v766
      %803 = vmatprep.subr.mxu0 %v769
      %804 = vmatpush1.msra.mxu0 %v768
      %805 = vmatprep.subr.mxu0 0.0
      %806 = vmatpush1.msra.mxu0 0.0
      %807 = vmatprep.subr.mxu0 0.0
      %808 = vmatpush1.msra.mxu0 0.0
      %809 = vmatprep.subr.mxu0 0.0
      %810 = vmatpush1.msra.mxu0 0.0
      %811 = vmatprep.subr.mxu0 0.0
      %812 = vmatpush1.msra.mxu0 0.0
      %813 = vmatprep.subr.mxu0 0.0
      %814 = vmatpush1.msra.mxu0 0.0
      %815 = vmatprep.subr.mxu0 0.0
      %816 = vmatpush1.msra.mxu0 0.0
      %817 = vmatprep.subr.mxu0 0.0
      %818 = vmatpush1.msra.mxu0 0.0
      %819 = vmatprep.subr.mxu0 0.0
      %820 = vmatpush1.msra.mxu0 0.0
      %821 = vmatprep.subr.mxu0 0.0
      %822 = vmatpush1.msra.mxu0 0.0
      %823 = vmatprep.subr.mxu0 0.0
      %824 = vmatpush1.msra.mxu0 0.0
      %825 = vmatprep.subr.mxu0 0.0
      %826 = vmatpush1.msra.mxu0 0.0
      %827 = vmatprep.subr.mxu0 0.0
      %828 = vmatpush1.msra.mxu0 0.0
      %829 = vmatprep.subr.mxu0 0.0
      %830 = vmatpush1.msra.mxu0 0.0
      %831 = vmatprep.subr.mxu0 0.0
      %832 = vmatpush1.msra.mxu0 0.0
      %833 = vmatprep.subr.mxu0 0.0
      %834 = vmatpush1.msra.mxu0 0.0
      %835 = vmatprep.subr.mxu0 0.0
      %836 = vmatpush1.msra.mxu0 0.0
      %837 = vmatprep.subr.mxu0 0.0
      %838 = vmatpush1.msra.mxu0 0.0
      %839 = vmatprep.subr.mxu0 0.0
      %840 = vmatpush1.msra.mxu0 0.0
      %841 = vmatprep.subr.mxu0 0.0
      %842 = vmatpush1.msra.mxu0 0.0
      %843 = vmatprep.subr.mxu0 0.0
      %844 = vmatpush1.msra.mxu0 0.0
      %845 = vmatprep.subr.mxu0 0.0
      %846 = vmatpush1.msra.mxu0 0.0
      %847 = vmatprep.subr.mxu0 0.0
      %848 = vmatpush1.msra.mxu0 0.0
      %849 = vmatprep.subr.mxu0 0.0
      %850 = vmatpush1.msra.mxu0 0.0
      %851 = vmatprep.subr.mxu0 0.0
      %852 = vmatpush1.msra.mxu0 0.0
      %853 = vmatprep.subr.mxu0 0.0
      %854 = vmatpush1.msra.mxu0 0.0
      %855 = vmatprep.subr.mxu0 0.0
      %856 = vmatpush1.msra.mxu0 0.0
      %857 = vmatprep.subr.mxu0 0.0
      %858 = vmatpush1.msra.mxu0 0.0
      %859 = vmatprep.subr.mxu0 0.0
      %860 = vmatpush1.msra.mxu0 0.0
      %861 = vmatprep.mubr.f32.mxu0 0.0
      %862 = vmatmul.mubr.f32.gmra.mrb[0].mxu0 %v783
      %v863 = vpop.f32.mrb[0].mxu0
      %v864 = vadd.f32 0.0, %v863
      %v865 = vpop.f32.mrb[0].mxu0
      %v866 = vadd.f32 0.0, %v865
      %867 = vmatprep.mubr.f32.mxu0 0.0
      %868 = vmatmul.mubr.f32.gmra.mrb[0].mxu0 %v786
      %v869 = vpop.f32.mrb[0].mxu0
      %v870 = vadd.f32 0.0, %v869
      %v871 = vpop.f32.mrb[0].mxu0
      %v872 = vadd.f32 0.0, %v871
      %873 = vmatprep.mubr.f32.mxu0 0.0
      %874 = vmatmul.mubr.f32.gmra.mrb[0].mxu0 %v789
      %v875 = vpop.f32.mrb[0].mxu0
      %v876 = vadd.f32 0.0, %v875
      %v877 = vpop.f32.mrb[0].mxu0
      %v878 = vadd.f32 0.0, %v877
      %879 = vmatprep.mubr.f32.mxu0 0.0
      %880 = vmatmul.mubr.f32.gmra.mrb[0].mxu0 %v792
      %v881 = vpop.f32.mrb[0].mxu0
      %v882 = vadd.f32 0.0, %v881
      %v883 = vpop.f32.mrb[0].mxu0
      %v884 = vadd.f32 0.0, %v883
      %885 = vmatprep.mubr.f32.mxu0 0.0
      %886 = vmatmul.mubr.f32.gmra.mrb[0].mxu0 %v795
      %v887 = vpop.f32.mrb[0].mxu0
      %v888 = vadd.f32 0.0, %v887
      %v889 = vpop.f32.mrb[0].mxu0
      %v890 = vadd.f32 0.0, %v889
      %891 = vdwg.mxu0
      %892 = vmatprep.subr.mxu0 0.0
      %893 = vmatpush1.msra.mxu0 %v742
      %894 = vmatprep.subr.mxu0 0.0
      %895 = vmatpush1.msra.mxu0 %v748
      %896 = vmatprep.subr.mxu0 0.0
      %897 = vmatpush1.msra.mxu0 %v754
      %898 = vmatprep.subr.mxu0 0.0
      %899 = vmatpush1.msra.mxu0 %v760
      %900 = vmatprep.subr.mxu0 0.0
      %901 = vmatpush1.msra.mxu0 0.0
      %902 = vmatprep.subr.mxu0 0.0
      %903 = vmatpush1.msra.mxu0 0.0
      %904 = vmatprep.subr.mxu0 0.0
      %905 = vmatpush1.msra.mxu0 0.0
      %906 = vmatprep.subr.mxu0 0.0
      %907 = vmatpush1.msra.mxu0 0.0
      %908 = vmatprep.subr.mxu0 0.0
      %909 = vmatpush1.msra.mxu0 0.0
      %910 = vmatprep.subr.mxu0 0.0
      %911 = vmatpush1.msra.mxu0 0.0
      %912 = vmatprep.subr.mxu0 0.0
      %913 = vmatpush1.msra.mxu0 0.0
      %914 = vmatprep.subr.mxu0 0.0
      %915 = vmatpush1.msra.mxu0 0.0
      %916 = vmatprep.subr.mxu0 0.0
      %917 = vmatpush1.msra.mxu0 0.0
      %918 = vmatprep.subr.mxu0 0.0
      %919 = vmatpush1.msra.mxu0 0.0
      %920 = vmatprep.subr.mxu0 0.0
      %921 = vmatpush1.msra.mxu0 0.0
      %922 = vmatprep.subr.mxu0 0.0
      %923 = vmatpush1.msra.mxu0 0.0
      %924 = vmatprep.subr.mxu0 0.0
      %925 = vmatpush1.msra.mxu0 0.0
      %926 = vmatprep.subr.mxu0 0.0
      %927 = vmatpush1.msra.mxu0 0.0
      %928 = vmatprep.subr.mxu0 0.0
      %929 = vmatpush1.msra.mxu0 0.0
      %930 = vmatprep.subr.mxu0 0.0
      %931 = vmatpush1.msra.mxu0 0.0
      %932 = vmatprep.subr.mxu0 0.0
      %933 = vmatpush1.msra.mxu0 0.0
      %934 = vmatprep.subr.mxu0 0.0
      %935 = vmatpush1.msra.mxu0 0.0
      %936 = vmatprep.subr.mxu0 0.0
      %937 = vmatpush1.msra.mxu0 0.0
      %938 = vmatprep.subr.mxu0 0.0
      %939 = vmatpush1.msra.mxu0 0.0
      %940 = vmatprep.subr.mxu0 0.0
      %941 = vmatpush1.msra.mxu0 0.0
      %942 = vmatprep.subr.mxu0 0.0
      %943 = vmatpush1.msra.mxu0 0.0
      %944 = vmatprep.subr.mxu0 0.0
      %945 = vmatpush1.msra.mxu0 0.0
      %946 = vmatprep.subr.mxu0 0.0
      %947 = vmatpush1.msra.mxu0 0.0
      %948 = vmatprep.subr.mxu0 0.0
      %949 = vmatpush1.msra.mxu0 0.0
      %950 = vmatprep.subr.mxu0 0.0
      %951 = vmatpush1.msra.mxu0 0.0
      %952 = vmatprep.subr.mxu0 0.0
      %953 = vmatpush1.msra.mxu0 0.0
      %954 = vmatprep.subr.mxu0 0.0
      %955 = vmatpush1.msra.mxu0 0.0
      %956 = vmatprep.mubr.f32.mxu0 0.0
      %957 = vmatmul.mubr.f32.gmra.mrb[0].mxu0 %v783
      %v958 = vpop.f32.mrb[0].mxu0
      %v959 = vadd.f32 0.0, %v958
      %v960 = vpop.f32.mrb[0].mxu0
      %961 = vmatprep.mubr.f32.mxu0 0.0
      %962 = vmatmul.mubr.f32.gmra.mrb[0].mxu0 %v786
      %v963 = vpop.f32.mrb[0].mxu0
      %v964 = vadd.f32 0.0, %v963
      %v965 = vpop.f32.mrb[0].mxu0
      %966 = vmatprep.mubr.f32.mxu0 0.0
      %967 = vmatmul.mubr.f32.gmra.mrb[0].mxu0 %v789
      %v968 = vpop.f32.mrb[0].mxu0
      %v969 = vadd.f32 0.0, %v968
      %v970 = vpop.f32.mrb[0].mxu0
      %971 = vmatprep.mubr.f32.mxu0 0.0
      %972 = vmatmul.mubr.f32.gmra.mrb[0].mxu0 %v792
      %v973 = vpop.f32.mrb[0].mxu0
      %v974 = vadd.f32 0.0, %v973
      %v975 = vpop.f32.mrb[0].mxu0
      %976 = vmatprep.mubr.f32.mxu0 0.0
      %977 = vmatmul.mubr.f32.gmra.mrb[0].mxu0 %v795
      %v978 = vpop.f32.mrb[0].mxu0
      %v979 = vadd.f32 0.0, %v978
      %v980 = vpop.f32.mrb[0].mxu0
      %981 = vdwg.mxu0
      %v982 = vadd.f32 %v613, %v864
      %v983 = vadd.f32 %v615, %v866
      %v984 = vadd.f32 %v708, %v959
      %v985 = vadd.f32 %v619, %v870
      %v986 = vadd.f32 %v621, %v872
      %v987 = vadd.f32 %v713, %v964
      %v988 = vadd.f32 %v625, %v876
      %v989 = vadd.f32 %v627, %v878
      %v990 = vadd.f32 %v718, %v969
      %v991 = vadd.f32 %v631, %v882
      %v992 = vadd.f32 %v633, %v884
      %v993 = vadd.f32 %v723, %v974
      %v994 = vadd.f32 %v637, %v888
      %v995 = vadd.f32 %v639, %v890
      %v996 = vadd.f32 %v728, %v979
      %s997 = scalar_lea.vmem %s1, 120
      %v998 = vld [vmem:[%s997] sm:$0xff]
      %v999 = vld [vmem:[%s997 + $0x8] sm:$0xff]
      %v1000 = vld [vmem:[%s997 + $0x10] sm:$0xff]
      %v1001 = vld [vmem:[%s997 + $0x18] sm:$0xff]
      %v1002 = vld [vmem:[%s997 + $0x20] sm:$0xff]
      %v1003 = vld [vmem:[%s245] sm:$0xff]
      %v1004 = vld [vmem:[%s245 + $0x8] sm:$0xff]
      %v1005 = vld [vmem:[%s245 + $0x10] sm:$0xff]
      %v1006 = vld [vmem:[%s245 + $0x18] sm:$0xff]
      %v1007 = vld [vmem:[%s245 + $0x20] sm:$0xff]
      %v1008 = vld [vmem:[%s245 + $0x28] sm:$0xff]
      %v1009 = vld [vmem:[%s245 + $0x30] sm:$0xff]
      %v1010 = vld [vmem:[%s245 + $0x38] sm:$0xff]
      %v1011 = vld [vmem:[%s245 + $0x40] sm:$0xff]
      %v1012 = vld [vmem:[%s245 + $0x48] sm:$0xff]
      %v1013 = vld [vmem:[%s245 + $0x50] sm:$0xff]
      %v1014 = vld [vmem:[%s245 + $0x58] sm:$0xff]
      %v1015 = vld [vmem:[%s245 + $0x60] sm:$0xff]
      %v1016 = vld [vmem:[%s245 + $0x68] sm:$0xff]
      %v1017 = vld [vmem:[%s245 + $0x70] sm:$0xff]
      %v1018 = vld [vmem:[%s245 + $0x78] sm:$0xff]
      %1035 = vrot.lane.b32.xlu0 %v1003, 104
      %v1036 = vpop.permute.xlu0 %1035
      %1037 = vrot.lane.b32.xlu0 %v1004, 104
      %v1038 = vpop.permute.xlu0 %1037
      %1039 = vrot.lane.b32.xlu0 %v1005, 104
      %v1040 = vpop.permute.xlu0 %1039
      %1041 = vrot.lane.b32.xlu0 %v1006, 104
      %v1042 = vpop.permute.xlu0 %1041
      %1043 = vrot.lane.b32.xlu0 %v1007, 104
      %v1044 = vpop.permute.xlu0 %1043
      %1045 = vrot.lane.b32.xlu0 %v1008, 104
      %v1046 = vpop.permute.xlu0 %1045
      %1047 = vrot.lane.b32.xlu0 %v1009, 104
      %v1048 = vpop.permute.xlu0 %1047
      %1049 = vrot.lane.b32.xlu0 %v1010, 104
      %v1050 = vpop.permute.xlu0 %1049
      %1051 = vrot.lane.b32.xlu0 %v1011, 104
      %v1052 = vpop.permute.xlu0 %1051
      %1053 = vrot.lane.b32.xlu0 %v1012, 104
      %v1054 = vpop.permute.xlu0 %1053
      %1055 = vrot.lane.b32.xlu0 %v1013, 104
      %v1056 = vpop.permute.xlu0 %1055
      %1057 = vrot.lane.b32.xlu0 %v1014, 104
      %v1058 = vpop.permute.xlu0 %1057
      %1059 = vrot.lane.b32.xlu0 %v1015, 104
      %v1060 = vpop.permute.xlu0 %1059
      %1061 = vrot.lane.b32.xlu0 %v1016, 104
      %v1062 = vpop.permute.xlu0 %1061
      %1063 = vrot.lane.b32.xlu0 %v1017, 104
      %v1064 = vpop.permute.xlu0 %1063
      %1065 = vrot.lane.b32.xlu0 %v1018, 104
      %v1066 = vpop.permute.xlu0 %1065
      %vm1067 = vcmask 850944
      %v1068 = vsel %vm1067, %v1036, %v1038
      %v1069 = vsel %vm1067, %v1038, %v1040
      %v1070 = vsel %vm1067, %v1040, %v1042
      %v1071 = vsel %vm1067, %v1044, %v1046
      %v1072 = vsel %vm1067, %v1046, %v1048
      %v1073 = vsel %vm1067, %v1048, %v1050
      %v1074 = vsel %vm1067, %v1052, %v1054
      %v1075 = vsel %vm1067, %v1054, %v1056
      %v1076 = vsel %vm1067, %v1056, %v1058
      %v1077 = vsel %vm1067, %v1060, %v1062
      %v1078 = vsel %vm1067, %v1062, %v1064
      %v1079 = vsel %vm1067, %v1064, %v1066
      %v1093 = vsel %vm330, %v998, 0
      %v1096 = vsel %vm330, %v999, 0
      %v1099 = vsel %vm330, %v1000, 0
      %v1102 = vsel %vm330, %v1001, 0
      %v1105 = vsel %vm330, %v1002, 0
      %1107 = vmatprep.subr.mxu0 %v1069
      %1108 = vmatpush1.msra.mxu0 %v1068
      %1109 = vmatprep.subr.mxu0 %v1072
      %1110 = vmatpush1.msra.mxu0 %v1071
      %1111 = vmatprep.subr.mxu0 %v1075
      %1112 = vmatpush1.msra.mxu0 %v1074
      %1113 = vmatprep.subr.mxu0 %v1078
      %1114 = vmatpush1.msra.mxu0 %v1077
      %1115 = vmatprep.subr.mxu0 0.0
      %1116 = vmatpush1.msra.mxu0 0.0
      %1117 = vmatprep.subr.mxu0 0.0
      %1118 = vmatpush1.msra.mxu0 0.0
      %1119 = vmatprep.subr.mxu0 0.0
      %1120 = vmatpush1.msra.mxu0 0.0
      %1121 = vmatprep.subr.mxu0 0.0
      %1122 = vmatpush1.msra.mxu0 0.0
      %1123 = vmatprep.subr.mxu0 0.0
      %1124 = vmatpush1.msra.mxu0 0.0
      %1125 = vmatprep.subr.mxu0 0.0
      %1126 = vmatpush1.msra.mxu0 0.0
      %1127 = vmatprep.subr.mxu0 0.0
      %1128 = vmatpush1.msra.mxu0 0.0
      %1129 = vmatprep.subr.mxu0 0.0
      %1130 = vmatpush1.msra.mxu0 0.0
      %1131 = vmatprep.subr.mxu0 0.0
      %1132 = vmatpush1.msra.mxu0 0.0
      %1133 = vmatprep.subr.mxu0 0.0
      %1134 = vmatpush1.msra.mxu0 0.0
      %1135 = vmatprep.subr.mxu0 0.0
      %1136 = vmatpush1.msra.mxu0 0.0
      %1137 = vmatprep.subr.mxu0 0.0
      %1138 = vmatpush1.msra.mxu0 0.0
      %1139 = vmatprep.subr.mxu0 0.0
      %1140 = vmatpush1.msra.mxu0 0.0
      %1141 = vmatprep.subr.mxu0 0.0
      %1142 = vmatpush1.msra.mxu0 0.0
      %1143 = vmatprep.subr.mxu0 0.0
      %1144 = vmatpush1.msra.mxu0 0.0
      %1145 = vmatprep.subr.mxu0 0.0
      %1146 = vmatpush1.msra.mxu0 0.0
      %1147 = vmatprep.subr.mxu0 0.0
      %1148 = vmatpush1.msra.mxu0 0.0
      %1149 = vmatprep.subr.mxu0 0.0
      %1150 = vmatpush1.msra.mxu0 0.0
      %1151 = vmatprep.subr.mxu0 0.0
      %1152 = vmatpush1.msra.mxu0 0.0
      %1153 = vmatprep.subr.mxu0 0.0
      %1154 = vmatpush1.msra.mxu0 0.0
      %1155 = vmatprep.subr.mxu0 0.0
      %1156 = vmatpush1.msra.mxu0 0.0
      %1157 = vmatprep.subr.mxu0 0.0
      %1158 = vmatpush1.msra.mxu0 0.0
      %1159 = vmatprep.subr.mxu0 0.0
      %1160 = vmatpush1.msra.mxu0 0.0
      %1161 = vmatprep.subr.mxu0 0.0
      %1162 = vmatpush1.msra.mxu0 0.0
      %1163 = vmatprep.subr.mxu0 0.0
      %1164 = vmatpush1.msra.mxu0 0.0
      %1165 = vmatprep.subr.mxu0 0.0
      %1166 = vmatpush1.msra.mxu0 0.0
      %1167 = vmatprep.subr.mxu0 0.0
      %1168 = vmatpush1.msra.mxu0 0.0
      %1169 = vmatprep.subr.mxu0 0.0
      %1170 = vmatpush1.msra.mxu0 0.0
      %1171 = vmatprep.mubr.f32.mxu0 0.0
      %1172 = vmatmul.mubr.f32.gmra.mrb[0].mxu0 %v1093
      %v1173 = vpop.f32.mrb[0].mxu0
      %v1174 = vadd.f32 0.0, %v1173
      %v1175 = vpop.f32.mrb[0].mxu0
      %v1176 = vadd.f32 0.0, %v1175
      %1177 = vmatprep.mubr.f32.mxu0 0.0
      %1178 = vmatmul.mubr.f32.gmra.mrb[0].mxu0 %v1096
      %v1179 = vpop.f32.mrb[0].mxu0
      %v1180 = vadd.f32 0.0, %v1179
      %v1181 = vpop.f32.mrb[0].mxu0
      %v1182 = vadd.f32 0.0, %v1181
      %1183 = vmatprep.mubr.f32.mxu0 0.0
      %1184 = vmatmul.mubr.f32.gmra.mrb[0].mxu0 %v1099
      %v1185 = vpop.f32.mrb[0].mxu0
      %v1186 = vadd.f32 0.0, %v1185
      %v1187 = vpop.f32.mrb[0].mxu0
      %v1188 = vadd.f32 0.0, %v1187
      %1189 = vmatprep.mubr.f32.mxu0 0.0
      %1190 = vmatmul.mubr.f32.gmra.mrb[0].mxu0 %v1102
      %v1191 = vpop.f32.mrb[0].mxu0
      %v1192 = vadd.f32 0.0, %v1191
      %v1193 = vpop.f32.mrb[0].mxu0
      %v1194 = vadd.f32 0.0, %v1193
      %1195 = vmatprep.mubr.f32.mxu0 0.0
      %1196 = vmatmul.mubr.f32.gmra.mrb[0].mxu0 %v1105
      %v1197 = vpop.f32.mrb[0].mxu0
      %v1198 = vadd.f32 0.0, %v1197
      %v1199 = vpop.f32.mrb[0].mxu0
      %v1200 = vadd.f32 0.0, %v1199
      %1201 = vdwg.mxu0
      %1202 = vmatprep.subr.mxu0 0.0
      %1203 = vmatpush1.msra.mxu0 %v1070
      %1204 = vmatprep.subr.mxu0 0.0
      %1205 = vmatpush1.msra.mxu0 %v1073
      %1206 = vmatprep.subr.mxu0 0.0
      %1207 = vmatpush1.msra.mxu0 %v1076
      %1208 = vmatprep.subr.mxu0 0.0
      %1209 = vmatpush1.msra.mxu0 %v1079
      %1210 = vmatprep.subr.mxu0 0.0
      %1211 = vmatpush1.msra.mxu0 0.0
      %1212 = vmatprep.subr.mxu0 0.0
      %1213 = vmatpush1.msra.mxu0 0.0
      %1214 = vmatprep.subr.mxu0 0.0
      %1215 = vmatpush1.msra.mxu0 0.0
      %1216 = vmatprep.subr.mxu0 0.0
      %1217 = vmatpush1.msra.mxu0 0.0
      %1218 = vmatprep.subr.mxu0 0.0
      %1219 = vmatpush1.msra.mxu0 0.0
      %1220 = vmatprep.subr.mxu0 0.0
      %1221 = vmatpush1.msra.mxu0 0.0
      %1222 = vmatprep.subr.mxu0 0.0
      %1223 = vmatpush1.msra.mxu0 0.0
      %1224 = vmatprep.subr.mxu0 0.0
      %1225 = vmatpush1.msra.mxu0 0.0
      %1226 = vmatprep.subr.mxu0 0.0
      %1227 = vmatpush1.msra.mxu0 0.0
      %1228 = vmatprep.subr.mxu0 0.0
      %1229 = vmatpush1.msra.mxu0 0.0
      %1230 = vmatprep.subr.mxu0 0.0
      %1231 = vmatpush1.msra.mxu0 0.0
      %1232 = vmatprep.subr.mxu0 0.0
      %1233 = vmatpush1.msra.mxu0 0.0
      %1234 = vmatprep.subr.mxu0 0.0
      %1235 = vmatpush1.msra.mxu0 0.0
      %1236 = vmatprep.subr.mxu0 0.0
      %1237 = vmatpush1.msra.mxu0 0.0
      %1238 = vmatprep.subr.mxu0 0.0
      %1239 = vmatpush1.msra.mxu0 0.0
      %1240 = vmatprep.subr.mxu0 0.0
      %1241 = vmatpush1.msra.mxu0 0.0
      %1242 = vmatprep.subr.mxu0 0.0
      %1243 = vmatpush1.msra.mxu0 0.0
      %1244 = vmatprep.subr.mxu0 0.0
      %1245 = vmatpush1.msra.mxu0 0.0
      %1246 = vmatprep.subr.mxu0 0.0
      %1247 = vmatpush1.msra.mxu0 0.0
      %1248 = vmatprep.subr.mxu0 0.0
      %1249 = vmatpush1.msra.mxu0 0.0
      %1250 = vmatprep.subr.mxu0 0.0
      %1251 = vmatpush1.msra.mxu0 0.0
      %1252 = vmatprep.subr.mxu0 0.0
      %1253 = vmatpush1.msra.mxu0 0.0
      %1254 = vmatprep.subr.mxu0 0.0
      %1255 = vmatpush1.msra.mxu0 0.0
      %1256 = vmatprep.subr.mxu0 0.0
      %1257 = vmatpush1.msra.mxu0 0.0
      %1258 = vmatprep.subr.mxu0 0.0
      %1259 = vmatpush1.msra.mxu0 0.0
      %1260 = vmatprep.subr.mxu0 0.0
      %1261 = vmatpush1.msra.mxu0 0.0
      %1262 = vmatprep.subr.mxu0 0.0
      %1263 = vmatpush1.msra.mxu0 0.0
      %1264 = vmatprep.subr.mxu0 0.0
      %1265 = vmatpush1.msra.mxu0 0.0
      %1266 = vmatprep.mubr.f32.mxu0 0.0
      %1267 = vmatmul.mubr.f32.gmra.mrb[0].mxu0 %v1093
      %v1268 = vpop.f32.mrb[0].mxu0
      %v1269 = vadd.f32 0.0, %v1268
      %v1270 = vpop.f32.mrb[0].mxu0
      %1271 = vmatprep.mubr.f32.mxu0 0.0
      %1272 = vmatmul.mubr.f32.gmra.mrb[0].mxu0 %v1096
      %v1273 = vpop.f32.mrb[0].mxu0
      %v1274 = vadd.f32 0.0, %v1273
      %v1275 = vpop.f32.mrb[0].mxu0
      %1276 = vmatprep.mubr.f32.mxu0 0.0
      %1277 = vmatmul.mubr.f32.gmra.mrb[0].mxu0 %v1099
      %v1278 = vpop.f32.mrb[0].mxu0
      %v1279 = vadd.f32 0.0, %v1278
      %v1280 = vpop.f32.mrb[0].mxu0
      %1281 = vmatprep.mubr.f32.mxu0 0.0
      %1282 = vmatmul.mubr.f32.gmra.mrb[0].mxu0 %v1102
      %v1283 = vpop.f32.mrb[0].mxu0
      %v1284 = vadd.f32 0.0, %v1283
      %v1285 = vpop.f32.mrb[0].mxu0
      %1286 = vmatprep.mubr.f32.mxu0 0.0
      %1287 = vmatmul.mubr.f32.gmra.mrb[0].mxu0 %v1105
      %v1288 = vpop.f32.mrb[0].mxu0
      %v1289 = vadd.f32 0.0, %v1288
      %v1290 = vpop.f32.mrb[0].mxu0
      %1291 = vdwg.mxu0
      %v1292 = vadd.f32 %v982, %v1174
      %v1293 = vadd.f32 %v983, %v1176
      %v1294 = vadd.f32 %v984, %v1269
      %v1295 = vadd.f32 %v985, %v1180
      %v1296 = vadd.f32 %v986, %v1182
      %v1297 = vadd.f32 %v987, %v1274
      %v1298 = vadd.f32 %v988, %v1186
      %v1299 = vadd.f32 %v989, %v1188
      %v1300 = vadd.f32 %v990, %v1279
      %v1301 = vadd.f32 %v991, %v1192
      %v1302 = vadd.f32 %v992, %v1194
      %v1303 = vadd.f32 %v993, %v1284
      %v1304 = vadd.f32 %v994, %v1198
      %v1305 = vadd.f32 %v995, %v1200
      %v1306 = vadd.f32 %v996, %v1289
      %s1307 = scalar_lea.vmem %s1, 160
      %v1308 = vld [vmem:[%s1307] sm:$0xff]
      %v1309 = vld [vmem:[%s1307 + $0x8] sm:$0xff]
      %v1310 = vld [vmem:[%s1307 + $0x10] sm:$0xff]
      %v1311 = vld [vmem:[%s1307 + $0x18] sm:$0xff]
      %v1312 = vld [vmem:[%s1307 + $0x20] sm:$0xff]
      %1313 = vrot.lane.b32.xlu0 %v1003, 96
      %v1314 = vpop.permute.xlu0 %1313
      %1315 = vrot.lane.b32.xlu0 %v1004, 96
      %v1316 = vpop.permute.xlu0 %1315
      %1317 = vrot.lane.b32.xlu0 %v1005, 96
      %v1318 = vpop.permute.xlu0 %1317
      %1319 = vrot.lane.b32.xlu0 %v1006, 96
      %v1320 = vpop.permute.xlu0 %1319
      %1321 = vrot.lane.b32.xlu0 %v1007, 96
      %v1322 = vpop.permute.xlu0 %1321
      %1323 = vrot.lane.b32.xlu0 %v1008, 96
      %v1324 = vpop.permute.xlu0 %1323
      %1325 = vrot.lane.b32.xlu0 %v1009, 96
      %v1326 = vpop.permute.xlu0 %1325
      %1327 = vrot.lane.b32.xlu0 %v1010, 96
      %v1328 = vpop.permute.xlu0 %1327
      %1329 = vrot.lane.b32.xlu0 %v1011, 96
      %v1330 = vpop.permute.xlu0 %1329
      %1331 = vrot.lane.b32.xlu0 %v1012, 96
      %v1332 = vpop.permute.xlu0 %1331
      %1333 = vrot.lane.b32.xlu0 %v1013, 96
      %v1334 = vpop.permute.xlu0 %1333
      %1335 = vrot.lane.b32.xlu0 %v1014, 96
      %v1336 = vpop.permute.xlu0 %1335
      %1337 = vrot.lane.b32.xlu0 %v1015, 96
      %v1338 = vpop.permute.xlu0 %1337
      %1339 = vrot.lane.b32.xlu0 %v1016, 96
      %v1340 = vpop.permute.xlu0 %1339
      %1341 = vrot.lane.b32.xlu0 %v1017, 96
      %v1342 = vpop.permute.xlu0 %1341
      %1343 = vrot.lane.b32.xlu0 %v1018, 96
      %v1344 = vpop.permute.xlu0 %1343
      %vm1345 = vcmask 785408
      %v1346 = vsel %vm1345, %v1314, %v1316
      %v1347 = vsel %vm1345, %v1316, %v1318
      %v1348 = vsel %vm1345, %v1318, %v1320
      %v1349 = vsel %vm1345, %v1322, %v1324
      %v1350 = vsel %vm1345, %v1324, %v1326
      %v1351 = vsel %vm1345, %v1326, %v1328
      %v1352 = vsel %vm1345, %v1330, %v1332
      %v1353 = vsel %vm1345, %v1332, %v1334
      %v1354 = vsel %vm1345, %v1334, %v1336
      %v1355 = vsel %vm1345, %v1338, %v1340
      %v1356 = vsel %vm1345, %v1340, %v1342
      %v1357 = vsel %vm1345, %v1342, %v1344
      %v1371 = vsel %vm330, %v1308, 0
      %v1374 = vsel %vm330, %v1309, 0
      %v1377 = vsel %vm330, %v1310, 0
      %v1380 = vsel %vm330, %v1311, 0
      %v1383 = vsel %vm330, %v1312, 0
      %1385 = vmatprep.subr.mxu0 %v1347
      %1386 = vmatpush1.msra.mxu0 %v1346
      %1387 = vmatprep.subr.mxu0 %v1350
      %1388 = vmatpush1.msra.mxu0 %v1349
      %1389 = vmatprep.subr.mxu0 %v1353
      %1390 = vmatpush1.msra.mxu0 %v1352
      %1391 = vmatprep.subr.mxu0 %v1356
      %1392 = vmatpush1.msra.mxu0 %v1355
      %1393 = vmatprep.subr.mxu0 0.0
      %1394 = vmatpush1.msra.mxu0 0.0
      %1395 = vmatprep.subr.mxu0 0.0
      %1396 = vmatpush1.msra.mxu0 0.0
      %1397 = vmatprep.subr.mxu0 0.0
      %1398 = vmatpush1.msra.mxu0 0.0
      %1399 = vmatprep.subr.mxu0 0.0
      %1400 = vmatpush1.msra.mxu0 0.0
      %1401 = vmatprep.subr.mxu0 0.0
      %1402 = vmatpush1.msra.mxu0 0.0
      %1403 = vmatprep.subr.mxu0 0.0
      %1404 = vmatpush1.msra.mxu0 0.0
      %1405 = vmatprep.subr.mxu0 0.0
      %1406 = vmatpush1.msra.mxu0 0.0
      %1407 = vmatprep.subr.mxu0 0.0
      %1408 = vmatpush1.msra.mxu0 0.0
      %1409 = vmatprep.subr.mxu0 0.0
      %1410 = vmatpush1.msra.mxu0 0.0
      %1411 = vmatprep.subr.mxu0 0.0
      %1412 = vmatpush1.msra.mxu0 0.0
      %1413 = vmatprep.subr.mxu0 0.0
      %1414 = vmatpush1.msra.mxu0 0.0
      %1415 = vmatprep.subr.mxu0 0.0
      %1416 = vmatpush1.msra.mxu0 0.0
      %1417 = vmatprep.subr.mxu0 0.0
      %1418 = vmatpush1.msra.mxu0 0.0
      %1419 = vmatprep.subr.mxu0 0.0
      %1420 = vmatpush1.msra.mxu0 0.0
      %1421 = vmatprep.subr.mxu0 0.0
      %1422 = vmatpush1.msra.mxu0 0.0
      %1423 = vmatprep.subr.mxu0 0.0
      %1424 = vmatpush1.msra.mxu0 0.0
      %1425 = vmatprep.subr.mxu0 0.0
      %1426 = vmatpush1.msra.mxu0 0.0
      %1427 = vmatprep.subr.mxu0 0.0
      %1428 = vmatpush1.msra.mxu0 0.0
      %1429 = vmatprep.subr.mxu0 0.0
      %1430 = vmatpush1.msra.mxu0 0.0
      %1431 = vmatprep.subr.mxu0 0.0
      %1432 = vmatpush1.msra.mxu0 0.0
      %1433 = vmatprep.subr.mxu0 0.0
      %1434 = vmatpush1.msra.mxu0 0.0
      %1435 = vmatprep.subr.mxu0 0.0
      %1436 = vmatpush1.msra.mxu0 0.0
      %1437 = vmatprep.subr.mxu0 0.0
      %1438 = vmatpush1.msra.mxu0 0.0
      %1439 = vmatprep.subr.mxu0 0.0
      %1440 = vmatpush1.msra.mxu0 0.0
      %1441 = vmatprep.subr.mxu0 0.0
      %1442 = vmatpush1.msra.mxu0 0.0
      %1443 = vmatprep.subr.mxu0 0.0
      %1444 = vmatpush1.msra.mxu0 0.0
      %1445 = vmatprep.subr.mxu0 0.0
      %1446 = vmatpush1.msra.mxu0 0.0
      %1447 = vmatprep.subr.mxu0 0.0
      %1448 = vmatpush1.msra.mxu0 0.0
      %1449 = vmatprep.mubr.f32.mxu0 0.0
      %1450 = vmatmul.mubr.f32.gmra.mrb[0].mxu0 %v1371
      %v1451 = vpop.f32.mrb[0].mxu0
      %v1452 = vadd.f32 0.0, %v1451
      %v1453 = vpop.f32.mrb[0].mxu0
      %v1454 = vadd.f32 0.0, %v1453
      %1455 = vmatprep.mubr.f32.mxu0 0.0
      %1456 = vmatmul.mubr.f32.gmra.mrb[0].mxu0 %v1374
      %v1457 = vpop.f32.mrb[0].mxu0
      %v1458 = vadd.f32 0.0, %v1457
      %v1459 = vpop.f32.mrb[0].mxu0
      %v1460 = vadd.f32 0.0, %v1459
      %1461 = vmatprep.mubr.f32.mxu0 0.0
      %1462 = vmatmul.mubr.f32.gmra.mrb[0].mxu0 %v1377
      %v1463 = vpop.f32.mrb[0].mxu0
      %v1464 = vadd.f32 0.0, %v1463
      %v1465 = vpop.f32.mrb[0].mxu0
      %v1466 = vadd.f32 0.0, %v1465
      %1467 = vmatprep.mubr.f32.mxu0 0.0
      %1468 = vmatmul.mubr.f32.gmra.mrb[0].mxu0 %v1380
      %v1469 = vpop.f32.mrb[0].mxu0
      %v1470 = vadd.f32 0.0, %v1469
      %v1471 = vpop.f32.mrb[0].mxu0
      %v1472 = vadd.f32 0.0, %v1471
      %1473 = vmatprep.mubr.f32.mxu0 0.0
      %1474 = vmatmul.mubr.f32.gmra.mrb[0].mxu0 %v1383
      %v1475 = vpop.f32.mrb[0].mxu0
      %v1476 = vadd.f32 0.0, %v1475
      %v1477 = vpop.f32.mrb[0].mxu0
      %v1478 = vadd.f32 0.0, %v1477
      %1479 = vdwg.mxu0
      %1480 = vmatprep.subr.mxu0 0.0
      %1481 = vmatpush1.msra.mxu0 %v1348
      %1482 = vmatprep.subr.mxu0 0.0
      %1483 = vmatpush1.msra.mxu0 %v1351
      %1484 = vmatprep.subr.mxu0 0.0
      %1485 = vmatpush1.msra.mxu0 %v1354
      %1486 = vmatprep.subr.mxu0 0.0
      %1487 = vmatpush1.msra.mxu0 %v1357
      %1488 = vmatprep.subr.mxu0 0.0
      %1489 = vmatpush1.msra.mxu0 0.0
      %1490 = vmatprep.subr.mxu0 0.0
      %1491 = vmatpush1.msra.mxu0 0.0
      %1492 = vmatprep.subr.mxu0 0.0
      %1493 = vmatpush1.msra.mxu0 0.0
      %1494 = vmatprep.subr.mxu0 0.0
      %1495 = vmatpush1.msra.mxu0 0.0
      %1496 = vmatprep.subr.mxu0 0.0
      %1497 = vmatpush1.msra.mxu0 0.0
      %1498 = vmatprep.subr.mxu0 0.0
      %1499 = vmatpush1.msra.mxu0 0.0
      %1500 = vmatprep.subr.mxu0 0.0
      %1501 = vmatpush1.msra.mxu0 0.0
      %1502 = vmatprep.subr.mxu0 0.0
      %1503 = vmatpush1.msra.mxu0 0.0
      %1504 = vmatprep.subr.mxu0 0.0
      %1505 = vmatpush1.msra.mxu0 0.0
      %1506 = vmatprep.subr.mxu0 0.0
      %1507 = vmatpush1.msra.mxu0 0.0
      %1508 = vmatprep.subr.mxu0 0.0
      %1509 = vmatpush1.msra.mxu0 0.0
      %1510 = vmatprep.subr.mxu0 0.0
      %1511 = vmatpush1.msra.mxu0 0.0
      %1512 = vmatprep.subr.mxu0 0.0
      %1513 = vmatpush1.msra.mxu0 0.0
      %1514 = vmatprep.subr.mxu0 0.0
      %1515 = vmatpush1.msra.mxu0 0.0
      %1516 = vmatprep.subr.mxu0 0.0
      %1517 = vmatpush1.msra.mxu0 0.0
      %1518 = vmatprep.subr.mxu0 0.0
      %1519 = vmatpush1.msra.mxu0 0.0
      %1520 = vmatprep.subr.mxu0 0.0
      %1521 = vmatpush1.msra.mxu0 0.0
      %1522 = vmatprep.subr.mxu0 0.0
      %1523 = vmatpush1.msra.mxu0 0.0
      %1524 = vmatprep.subr.mxu0 0.0
      %1525 = vmatpush1.msra.mxu0 0.0
      %1526 = vmatprep.subr.mxu0 0.0
      %1527 = vmatpush1.msra.mxu0 0.0
      %1528 = vmatprep.subr.mxu0 0.0
      %1529 = vmatpush1.msra.mxu0 0.0
      %1530 = vmatprep.subr.mxu0 0.0
      %1531 = vmatpush1.msra.mxu0 0.0
      %1532 = vmatprep.subr.mxu0 0.0
      %1533 = vmatpush1.msra.mxu0 0.0
      %1534 = vmatprep.subr.mxu0 0.0
      %1535 = vmatpush1.msra.mxu0 0.0
      %1536 = vmatprep.subr.mxu0 0.0
      %1537 = vmatpush1.msra.mxu0 0.0
      %1538 = vmatprep.subr.mxu0 0.0
      %1539 = vmatpush1.msra.mxu0 0.0
      %1540 = vmatprep.subr.mxu0 0.0
      %1541 = vmatpush1.msra.mxu0 0.0
      %1542 = vmatprep.subr.mxu0 0.0
      %1543 = vmatpush1.msra.mxu0 0.0
      %1544 = vmatprep.mubr.f32.mxu0 0.0
      %1545 = vmatmul.mubr.f32.gmra.mrb[0].mxu0 %v1371
      %v1546 = vpop.f32.mrb[0].mxu0
      %v1547 = vadd.f32 0.0, %v1546
      %v1548 = vpop.f32.mrb[0].mxu0
      %1549 = vmatprep.mubr.f32.mxu0 0.0
      %1550 = vmatmul.mubr.f32.gmra.mrb[0].mxu0 %v1374
      %v1551 = vpop.f32.mrb[0].mxu0
      %v1552 = vadd.f32 0.0, %v1551
      %v1553 = vpop.f32.mrb[0].mxu0
      %1554 = vmatprep.mubr.f32.mxu0 0.0
      %1555 = vmatmul.mubr.f32.gmra.mrb[0].mxu0 %v1377
      %v1556 = vpop.f32.mrb[0].mxu0
      %v1557 = vadd.f32 0.0, %v1556
      %v1558 = vpop.f32.mrb[0].mxu0
      %1559 = vmatprep.mubr.f32.mxu0 0.0
      %1560 = vmatmul.mubr.f32.gmra.mrb[0].mxu0 %v1380
      %v1561 = vpop.f32.mrb[0].mxu0
      %v1562 = vadd.f32 0.0, %v1561
      %v1563 = vpop.f32.mrb[0].mxu0
      %1564 = vmatprep.mubr.f32.mxu0 0.0
      %1565 = vmatmul.mubr.f32.gmra.mrb[0].mxu0 %v1383
      %v1566 = vpop.f32.mrb[0].mxu0
      %v1567 = vadd.f32 0.0, %v1566
      %v1568 = vpop.f32.mrb[0].mxu0
      %1569 = vdwg.mxu0
      %v1570 = vadd.f32 %v1292, %v1452
      %v1571 = vadd.f32 %v1293, %v1454
      %v1572 = vadd.f32 %v1294, %v1547
      %v1573 = vadd.f32 %v1295, %v1458
      %v1574 = vadd.f32 %v1296, %v1460
      %v1575 = vadd.f32 %v1297, %v1552
      %v1576 = vadd.f32 %v1298, %v1464
      %v1577 = vadd.f32 %v1299, %v1466
      %v1578 = vadd.f32 %v1300, %v1557
      %v1579 = vadd.f32 %v1301, %v1470
      %v1580 = vadd.f32 %v1302, %v1472
      %v1581 = vadd.f32 %v1303, %v1562
      %v1582 = vadd.f32 %v1304, %v1476
      %v1583 = vadd.f32 %v1305, %v1478
      %v1584 = vadd.f32 %v1306, %v1567
      %v1585 = vld [vmem:[%s3] sm:$0xff]
      %v1586 = vld [vmem:[%s3 + $0x8] sm:$0xff]
      %v1587 = vld [vmem:[%s3 + $0x10] sm:$0xff]
      %v1588 = vld [vmem:[%s3 + $0x18] sm:$0xff]
      %v1589 = vld [vmem:[%s3 + $0x20] sm:$0xff]
      %1591 = vset.pattern.permute.xlu0 0
      %1592 = vperm.xlu0 %1591, %v1585
      %v1593 = vpop.permute.xlu0 %1592
      %1596 = vset.pattern.permute.xlu0 0
      %1597 = vperm.xlu0 %1596, %v1586
      %v1598 = vpop.permute.xlu0 %1597
      %1601 = vset.pattern.permute.xlu0 0
      %1602 = vperm.xlu0 %1601, %v1587
      %v1603 = vpop.permute.xlu0 %1602
      %1606 = vset.pattern.permute.xlu0 0
      %1607 = vperm.xlu0 %1606, %v1588
      %v1608 = vpop.permute.xlu0 %1607
      %1611 = vset.pattern.permute.xlu0 0
      %1612 = vperm.xlu0 %1611, %v1589
      %v1613 = vpop.permute.xlu0 %1612
      %v1615 = vadd.f32 %v1570, %v1593
      %v1616 = vadd.f32 %v1571, %v1593
      %v1617 = vadd.f32 %v1572, %v1593
      %v1618 = vadd.f32 %v1573, %v1598
      %v1619 = vadd.f32 %v1574, %v1598
      %v1620 = vadd.f32 %v1575, %v1598
      %v1621 = vadd.f32 %v1576, %v1603
      %v1622 = vadd.f32 %v1577, %v1603
      %v1623 = vadd.f32 %v1578, %v1603
      %v1624 = vadd.f32 %v1579, %v1608
      %v1625 = vadd.f32 %v1580, %v1608
      %v1626 = vadd.f32 %v1581, %v1608
      %v1627 = vadd.f32 %v1582, %v1613
      %v1628 = vadd.f32 %v1583, %v1613
      %v1629 = vadd.f32 %v1584, %v1613
      %vm1630 = vcmp.gt.f32.partialorder %v1615, 0.0
      %vm1631 = vcmp.gt.f32.partialorder %v1616, 0.0
      %vm1632 = vcmp.gt.f32.partialorder %v1617, 0.0
      %vm1633 = vcmp.gt.f32.partialorder %v1618, 0.0
      %vm1634 = vcmp.gt.f32.partialorder %v1619, 0.0
      %vm1635 = vcmp.gt.f32.partialorder %v1620, 0.0
      %vm1636 = vcmp.gt.f32.partialorder %v1621, 0.0
      %vm1637 = vcmp.gt.f32.partialorder %v1622, 0.0
      %vm1638 = vcmp.gt.f32.partialorder %v1623, 0.0
      %vm1639 = vcmp.gt.f32.partialorder %v1624, 0.0
      %vm1640 = vcmp.gt.f32.partialorder %v1625, 0.0
      %vm1641 = vcmp.gt.f32.partialorder %v1626, 0.0
      %vm1642 = vcmp.gt.f32.partialorder %v1627, 0.0
      %vm1643 = vcmp.gt.f32.partialorder %v1628, 0.0
      %vm1644 = vcmp.gt.f32.partialorder %v1629, 0.0
      %v1645 = vmin.f32 %v1615, 0.0
      %v1646 = vmin.f32 %v1616, 0.0
      %v1647 = vmin.f32 %v1617, 0.0
      %v1648 = vmin.f32 %v1618, 0.0
      %v1649 = vmin.f32 %v1619, 0.0
      %v1650 = vmin.f32 %v1620, 0.0
      %v1651 = vmin.f32 %v1621, 0.0
      %v1652 = vmin.f32 %v1622, 0.0
      %v1653 = vmin.f32 %v1623, 0.0
      %v1654 = vmin.f32 %v1624, 0.0
      %v1655 = vmin.f32 %v1625, 0.0
      %v1656 = vmin.f32 %v1626, 0.0
      %v1657 = vmin.f32 %v1627, 0.0
      %v1658 = vmin.f32 %v1628, 0.0
      %v1659 = vmin.f32 %v1629, 0.0
      %v1660 = vmul.f32 %v1645, 1.442695
      %v1661 = vpow.pop %v1660
      %v1662 = vmul.f32 %v1646, 1.442695
      %v1663 = vpow.pop %v1662
      %v1664 = vmul.f32 %v1647, 1.442695
      %v1665 = vpow.pop %v1664
      %v1666 = vmul.f32 %v1648, 1.442695
      %v1667 = vpow.pop %v1666
      %v1668 = vmul.f32 %v1649, 1.442695
      %v1669 = vpow.pop %v1668
      %v1670 = vmul.f32 %v1650, 1.442695
      %v1671 = vpow.pop %v1670
      %v1672 = vmul.f32 %v1651, 1.442695
      %v1673 = vpow.pop %v1672
      %v1674 = vmul.f32 %v1652, 1.442695
      %v1675 = vpow.pop %v1674
      %v1676 = vmul.f32 %v1653, 1.442695
      %v1677 = vpow.pop %v1676
      %v1678 = vmul.f32 %v1654, 1.442695
      %v1679 = vpow.pop %v1678
      %v1680 = vmul.f32 %v1655, 1.442695
      %v1681 = vpow.pop %v1680
      %v1682 = vmul.f32 %v1656, 1.442695
      %v1683 = vpow.pop %v1682
      %v1684 = vmul.f32 %v1657, 1.442695
      %v1685 = vpow.pop %v1684
      %v1686 = vmul.f32 %v1658, 1.442695
      %v1687 = vpow.pop %v1686
      %v1688 = vmul.f32 %v1659, 1.442695
      %v1689 = vpow.pop %v1688
      %v1690 = vsub.f32 %v1661, 1.0
      %v1691 = vsub.f32 %v1663, 1.0
      %v1692 = vsub.f32 %v1665, 1.0
      %v1693 = vsub.f32 %v1667, 1.0
      %v1694 = vsub.f32 %v1669, 1.0
      %v1695 = vsub.f32 %v1671, 1.0
      %v1696 = vsub.f32 %v1673, 1.0
      %v1697 = vsub.f32 %v1675, 1.0
      %v1698 = vsub.f32 %v1677, 1.0
      %v1699 = vsub.f32 %v1679, 1.0
      %v1700 = vsub.f32 %v1681, 1.0
      %v1701 = vsub.f32 %v1683, 1.0
      %v1702 = vsub.f32 %v1685, 1.0
      %v1703 = vsub.f32 %v1687, 1.0
      %v1704 = vsub.f32 %v1689, 1.0
      %v1705 = vsel %vm1630, %v1615, %v1690
      %v1706 = vsel %vm1631, %v1616, %v1691
      %v1707 = vsel %vm1632, %v1617, %v1692
      %v1708 = vsel %vm1633, %v1618, %v1693
      %v1709 = vsel %vm1634, %v1619, %v1694
      %v1710 = vsel %vm1635, %v1620, %v1695
      %v1711 = vsel %vm1636, %v1621, %v1696
      %v1712 = vsel %vm1637, %v1622, %v1697
      %v1713 = vsel %vm1638, %v1623, %v1698
      %v1714 = vsel %vm1639, %v1624, %v1699
      %v1715 = vsel %vm1640, %v1625, %v1700
      %v1716 = vsel %vm1641, %v1626, %v1701
      %v1717 = vsel %vm1642, %v1627, %v1702
      %v1718 = vsel %vm1643, %v1628, %v1703
      %v1719 = vsel %vm1644, %v1629, %v1704
      %v1720 = vld [vmem:[%s4] sm:$0xff]
      %v1721 = vld [vmem:[%s4 + $0x8] sm:$0xff]
      %v1722 = vld [vmem:[%s4 + $0x10] sm:$0xff]
      %v1723 = vld [vmem:[%s4 + $0x18] sm:$0xff]
      %v1724 = vld [vmem:[%s4 + $0x20] sm:$0xff]
      %v1725 = vld [vmem:[%s4 + $0x28] sm:$0xff]
      %v1726 = vld [vmem:[%s4 + $0x30] sm:$0xff]
      %v1727 = vld [vmem:[%s4 + $0x38] sm:$0xff]
      %v1728 = vld [vmem:[%s4 + $0x40] sm:$0xff]
      %v1729 = vld [vmem:[%s4 + $0x48] sm:$0xff]
      %v1730 = vld [vmem:[%s4 + $0x50] sm:$0xff]
      %v1731 = vld [vmem:[%s4 + $0x58] sm:$0xff]
      %v1732 = vld [vmem:[%s4 + $0x60] sm:$0xff]
      %v1733 = vld [vmem:[%s4 + $0x68] sm:$0xff]
      %v1734 = vld [vmem:[%s4 + $0x70] sm:$0xff]
      %v1735 = vld [vmem:[%s4 + $0x78] sm:$0xff]
      %v1736 = vld [vmem:[%s4 + $0x80] sm:$0xff]
      %v1737 = vld [vmem:[%s4 + $0x88] sm:$0xff]
      %v1738 = vld [vmem:[%s4 + $0x90] sm:$0xff]
      %v1739 = vld [vmem:[%s4 + $0x98] sm:$0xff]
      %v1740 = vld [vmem:[%s4 + $0xa0] sm:$0xff]
      %v1741 = vld [vmem:[%s4 + $0xa8] sm:$0xff]
      %v1742 = vld [vmem:[%s4 + $0xb0] sm:$0xff]
      %v1743 = vld [vmem:[%s4 + $0xb8] sm:$0xff]
      %v1744 = vld [vmem:[%s4 + $0xc0] sm:$0xff]
      %v1745 = vld [vmem:[%s4 + $0xc8] sm:$0xff]
      %v1746 = vld [vmem:[%s4 + $0xd0] sm:$0xff]
      %v1747 = vld [vmem:[%s4 + $0xd8] sm:$0xff]
      %v1748 = vld [vmem:[%s4 + $0xe0] sm:$0xff]
      %v1749 = vld [vmem:[%s4 + $0xe8] sm:$0xff]
      %v1750 = vld [vmem:[%s4 + $0xf0] sm:$0xff]
      %v1751 = vld [vmem:[%s4 + $0xf8] sm:$0xff]
      %v1752 = vld [vmem:[%s4 + $0x100] sm:$0xff]
      %v1753 = vld [vmem:[%s4 + $0x108] sm:$0xff]
      %v1754 = vld [vmem:[%s4 + $0x110] sm:$0xff]
      %v1755 = vld [vmem:[%s4 + $0x118] sm:$0xff]
      %v1756 = vld [vmem:[%s4 + $0x120] sm:$0xff]
      %v1757 = vld [vmem:[%s4 + $0x128] sm:$0xff]
      %v1758 = vld [vmem:[%s4 + $0x130] sm:$0xff]
      %v1759 = vld [vmem:[%s4 + $0x138] sm:$0xff]
      %v1760 = vld [vmem:[%s4 + $0x140] sm:$0xff]
      %v1761 = vld [vmem:[%s4 + $0x148] sm:$0xff]
      %v1762 = vld [vmem:[%s4 + $0x150] sm:$0xff]
      %v1763 = vld [vmem:[%s4 + $0x158] sm:$0xff]
      %v1764 = vld [vmem:[%s4 + $0x160] sm:$0xff]
      %v1765 = vld [vmem:[%s4 + $0x168] sm:$0x1]
      %vm1766 = vcmask 859136
      %v1768 = vsel %vm1766, %v1707, 0
      %v1771 = vsel %vm1766, %v1710, 0
      %v1774 = vsel %vm1766, %v1713, 0
      %v1777 = vsel %vm1766, %v1716, 0
      %v1780 = vsel %vm1766, %v1719, 0
      %vm1782 = vcmask 1040384
      %v1784 = vsel %vm1782, %v1765, 0
      %1786 = vmatprep.subr.mxu0 0.0
      %1787 = vmatpush1.msra.mxu0 %v1720
      %1788 = vmatprep.subr.mxu0 0.0
      %1789 = vmatpush1.msra.mxu0 %v1721
      %1790 = vmatprep.subr.mxu0 0.0
      %1791 = vmatpush1.msra.mxu0 %v1722
      %1792 = vmatprep.subr.mxu0 0.0
      %1793 = vmatpush1.msra.mxu0 %v1723
      %1794 = vmatprep.subr.mxu0 0.0
      %1795 = vmatpush1.msra.mxu0 %v1724
      %1796 = vmatprep.subr.mxu0 0.0
      %1797 = vmatpush1.msra.mxu0 %v1725
      %1798 = vmatprep.subr.mxu0 0.0
      %1799 = vmatpush1.msra.mxu0 %v1726
      %1800 = vmatprep.subr.mxu0 0.0
      %1801 = vmatpush1.msra.mxu0 %v1727
      %1802 = vmatprep.subr.mxu0 0.0
      %1803 = vmatpush1.msra.mxu0 %v1728
      %1804 = vmatprep.subr.mxu0 0.0
      %1805 = vmatpush1.msra.mxu0 %v1729
      %1806 = vmatprep.subr.mxu0 0.0
      %1807 = vmatpush1.msra.mxu0 %v1730
      %1808 = vmatprep.subr.mxu0 0.0
      %1809 = vmatpush1.msra.mxu0 %v1731
      %1810 = vmatprep.subr.mxu0 0.0
      %1811 = vmatpush1.msra.mxu0 %v1732
      %1812 = vmatprep.subr.mxu0 0.0
      %1813 = vmatpush1.msra.mxu0 %v1733
      %1814 = vmatprep.subr.mxu0 0.0
      %1815 = vmatpush1.msra.mxu0 %v1734
      %1816 = vmatprep.subr.mxu0 0.0
      %1817 = vmatpush1.msra.mxu0 %v1735
      %1818 = vmatprep.subr.mxu0 0.0
      %1819 = vmatpush1.msra.mxu0 %v1736
      %1820 = vmatprep.subr.mxu0 0.0
      %1821 = vmatpush1.msra.mxu0 %v1737
      %1822 = vmatprep.subr.mxu0 0.0
      %1823 = vmatpush1.msra.mxu0 %v1738
      %1824 = vmatprep.subr.mxu0 0.0
      %1825 = vmatpush1.msra.mxu0 %v1739
      %1826 = vmatprep.subr.mxu0 0.0
      %1827 = vmatpush1.msra.mxu0 %v1740
      %1828 = vmatprep.subr.mxu0 0.0
      %1829 = vmatpush1.msra.mxu0 %v1741
      %1830 = vmatprep.subr.mxu0 0.0
      %1831 = vmatpush1.msra.mxu0 %v1742
      %1832 = vmatprep.subr.mxu0 0.0
      %1833 = vmatpush1.msra.mxu0 %v1743
      %1834 = vmatprep.subr.mxu0 0.0
      %1835 = vmatpush1.msra.mxu0 %v1744
      %1836 = vmatprep.subr.mxu0 0.0
      %1837 = vmatpush1.msra.mxu0 %v1745
      %1838 = vmatprep.subr.mxu0 0.0
      %1839 = vmatpush1.msra.mxu0 %v1746
      %1840 = vmatprep.subr.mxu0 0.0
      %1841 = vmatpush1.msra.mxu0 %v1747
      %1842 = vmatprep.subr.mxu0 0.0
      %1843 = vmatpush1.msra.mxu0 %v1748
      %1844 = vmatprep.subr.mxu0 0.0
      %1845 = vmatpush1.msra.mxu0 %v1749
      %1846 = vmatprep.subr.mxu0 0.0
      %1847 = vmatpush1.msra.mxu0 %v1750
      %1848 = vmatprep.subr.mxu0 0.0
      %1849 = vmatpush1.msra.mxu0 %v1751
      %1850 = vmatprep.mubr.f32.mxu0 %v1706
      %1851 = vmatmul.mubr.f32.gmra.mrb[0].mxu0 %v1705
      %v1852 = vpop.f32.mrb[0].mxu0
      %v1853 = vadd.f32 0.0, %v1852
      %v1854 = vpop.f32.mrb[0].mxu0
      %1855 = vmatprep.mubr.f32.mxu0 %v1709
      %1856 = vmatmul.mubr.f32.gmra.mrb[0].mxu0 %v1708
      %v1857 = vpop.f32.mrb[0].mxu0
      %v1858 = vadd.f32 0.0, %v1857
      %v1859 = vpop.f32.mrb[0].mxu0
      %1860 = vmatprep.mubr.f32.mxu0 %v1712
      %1861 = vmatmul.mubr.f32.gmra.mrb[0].mxu0 %v1711
      %v1862 = vpop.f32.mrb[0].mxu0
      %v1863 = vadd.f32 0.0, %v1862
      %v1864 = vpop.f32.mrb[0].mxu0
      %1865 = vmatprep.mubr.f32.mxu0 %v1715
      %1866 = vmatmul.mubr.f32.gmra.mrb[0].mxu0 %v1714
      %v1867 = vpop.f32.mrb[0].mxu0
      %v1868 = vadd.f32 0.0, %v1867
      %v1869 = vpop.f32.mrb[0].mxu0
      %1870 = vmatprep.mubr.f32.mxu0 %v1718
      %1871 = vmatmul.mubr.f32.gmra.mrb[0].mxu0 %v1717
      %v1872 = vpop.f32.mrb[0].mxu0
      %v1873 = vadd.f32 0.0, %v1872
      %v1874 = vpop.f32.mrb[0].mxu0
      %1875 = vdwg.mxu0
      %1876 = vmatprep.subr.mxu0 0.0
      %1877 = vmatpush1.msra.mxu0 %v1752
      %1878 = vmatprep.subr.mxu0 0.0
      %1879 = vmatpush1.msra.mxu0 %v1753
      %1880 = vmatprep.subr.mxu0 0.0
      %1881 = vmatpush1.msra.mxu0 %v1754
      %1882 = vmatprep.subr.mxu0 0.0
      %1883 = vmatpush1.msra.mxu0 %v1755
      %1884 = vmatprep.subr.mxu0 0.0
      %1885 = vmatpush1.msra.mxu0 %v1756
      %1886 = vmatprep.subr.mxu0 0.0
      %1887 = vmatpush1.msra.mxu0 %v1757
      %1888 = vmatprep.subr.mxu0 0.0
      %1889 = vmatpush1.msra.mxu0 %v1758
      %1890 = vmatprep.subr.mxu0 0.0
      %1891 = vmatpush1.msra.mxu0 %v1759
      %1892 = vmatprep.subr.mxu0 0.0
      %1893 = vmatpush1.msra.mxu0 %v1760
      %1894 = vmatprep.subr.mxu0 0.0
      %1895 = vmatpush1.msra.mxu0 %v1761
      %1896 = vmatprep.subr.mxu0 0.0
      %1897 = vmatpush1.msra.mxu0 %v1762
      %1898 = vmatprep.subr.mxu0 0.0
      %1899 = vmatpush1.msra.mxu0 %v1763
      %1900 = vmatprep.subr.mxu0 0.0
      %1901 = vmatpush1.msra.mxu0 %v1764
      %1902 = vmatprep.subr.mxu0 0.0
      %1903 = vmatpush1.msra.mxu0 %v1784
      %1904 = vmatprep.subr.mxu0 0.0
      %1905 = vmatpush1.msra.mxu0 0.0
      %1906 = vmatprep.subr.mxu0 0.0
      %1907 = vmatpush1.msra.mxu0 0.0
      %1908 = vmatprep.subr.mxu0 0.0
      %1909 = vmatpush1.msra.mxu0 0.0
      %1910 = vmatprep.subr.mxu0 0.0
      %1911 = vmatpush1.msra.mxu0 0.0
      %1912 = vmatprep.subr.mxu0 0.0
      %1913 = vmatpush1.msra.mxu0 0.0
      %1914 = vmatprep.subr.mxu0 0.0
      %1915 = vmatpush1.msra.mxu0 0.0
      %1916 = vmatprep.subr.mxu0 0.0
      %1917 = vmatpush1.msra.mxu0 0.0
      %1918 = vmatprep.subr.mxu0 0.0
      %1919 = vmatpush1.msra.mxu0 0.0
      %1920 = vmatprep.subr.mxu0 0.0
      %1921 = vmatpush1.msra.mxu0 0.0
      %1922 = vmatprep.subr.mxu0 0.0
      %1923 = vmatpush1.msra.mxu0 0.0
      %1924 = vmatprep.subr.mxu0 0.0
      %1925 = vmatpush1.msra.mxu0 0.0
      %1926 = vmatprep.subr.mxu0 0.0
      %1927 = vmatpush1.msra.mxu0 0.0
      %1928 = vmatprep.subr.mxu0 0.0
      %1929 = vmatpush1.msra.mxu0 0.0
      %1930 = vmatprep.subr.mxu0 0.0
      %1931 = vmatpush1.msra.mxu0 0.0
      %1932 = vmatprep.subr.mxu0 0.0
      %1933 = vmatpush1.msra.mxu0 0.0
      %1934 = vmatprep.subr.mxu0 0.0
      %1935 = vmatpush1.msra.mxu0 0.0
      %1936 = vmatprep.subr.mxu0 0.0
      %1937 = vmatpush1.msra.mxu0 0.0
      %1938 = vmatprep.subr.mxu0 0.0
      %1939 = vmatpush1.msra.mxu0 0.0
      %1940 = vmatprep.mubr.f32.mxu0 0.0
      %1941 = vmatmul.mubr.f32.gmra.mrb[0].mxu0 %v1768
      %v1942 = vpop.f32.mrb[0].mxu0
      %v1943 = vadd.f32 %v1853, %v1942
      %v1944 = vpop.f32.mrb[0].mxu0
      %1945 = vmatprep.mubr.f32.mxu0 0.0
      %1946 = vmatmul.mubr.f32.gmra.mrb[0].mxu0 %v1771
      %v1947 = vpop.f32.mrb[0].mxu0
      %v1948 = vadd.f32 %v1858, %v1947
      %v1949 = vpop.f32.mrb[0].mxu0
      %1950 = vmatprep.mubr.f32.mxu0 0.0
      %1951 = vmatmul.mubr.f32.gmra.mrb[0].mxu0 %v1774
      %v1952 = vpop.f32.mrb[0].mxu0
      %v1953 = vadd.f32 %v1863, %v1952
      %v1954 = vpop.f32.mrb[0].mxu0
      %1955 = vmatprep.mubr.f32.mxu0 0.0
      %1956 = vmatmul.mubr.f32.gmra.mrb[0].mxu0 %v1777
      %v1957 = vpop.f32.mrb[0].mxu0
      %v1958 = vadd.f32 %v1868, %v1957
      %v1959 = vpop.f32.mrb[0].mxu0
      %1960 = vmatprep.mubr.f32.mxu0 0.0
      %1961 = vmatmul.mubr.f32.gmra.mrb[0].mxu0 %v1780
      %v1962 = vpop.f32.mrb[0].mxu0
      %v1963 = vadd.f32 %v1873, %v1962
      %v1964 = vpop.f32.mrb[0].mxu0
      %1965 = vdwg.mxu0
      %v1966 = vld [vmem:[%s2] sm:$0xff]
      %v1967 = vld [vmem:[%s2 + $0x8] sm:$0xff]
      %v1968 = vld [vmem:[%s2 + $0x10] sm:$0xff]
      %v1969 = vld [vmem:[%s2 + $0x18] sm:$0xff]
      %v1970 = vld [vmem:[%s2 + $0x20] sm:$0xff]
      %v1971 = vld [vmem:[%s2 + $0x28] sm:$0xff]
      %v1972 = vld [vmem:[%s2 + $0x30] sm:$0xff]
      %v1973 = vld [vmem:[%s2 + $0x38] sm:$0xff]
      %v1974 = vld [vmem:[%s2 + $0x40] sm:$0xff]
      %v1975 = vld [vmem:[%s2 + $0x48] sm:$0xff]
      %v1976 = vld [vmem:[%s2 + $0x50] sm:$0xff]
      %v1977 = vld [vmem:[%s2 + $0x58] sm:$0xff]
      %v1978 = vld [vmem:[%s2 + $0x60] sm:$0xf]
      %vm1979 = vcmask 326656
      %v1981 = vsel %vm1979, %v1966, 0
      %v1984 = vsel %vm1979, %v1967, 0
      %v1987 = vsel %vm1979, %v1968, 0
      %v1990 = vsel %vm1979, %v1969, 0
      %v1993 = vsel %vm1979, %v1970, 0
      %v1996 = vsel %vm1979, %v1971, 0
      %v1999 = vsel %vm1979, %v1972, 0
      %v2002 = vsel %vm1979, %v1973, 0
      %v2005 = vsel %vm1979, %v1974, 0
      %v2008 = vsel %vm1979, %v1975, 0
      %v2011 = vsel %vm1979, %v1976, 0
      %v2014 = vsel %vm1979, %v1977, 0
      %v2017 = vsel %vm1979, %v1978, 0
      %2019 = vmatprep.subr.mxu0 0.0
      %2020 = vmatpush1.msra.mxu0 %v1943
      %2021 = vmatprep.subr.mxu0 0.0
      %2022 = vmatpush1.msra.mxu0 %v1948
      %2023 = vmatprep.subr.mxu0 0.0
      %2024 = vmatpush1.msra.mxu0 %v1953
      %2025 = vmatprep.subr.mxu0 0.0
      %2026 = vmatpush1.msra.mxu0 %v1958
      %2027 = vmatprep.subr.mxu0 0.0
      %2028 = vmatpush1.msra.mxu0 %v1963
      %2029 = vmatprep.subr.mxu0 0.0
      %2030 = vmatpush1.msra.mxu0 0.0
      %2031 = vmatprep.subr.mxu0 0.0
      %2032 = vmatpush1.msra.mxu0 0.0
      %2033 = vmatprep.subr.mxu0 0.0
      %2034 = vmatpush1.msra.mxu0 0.0
      %2035 = vmatprep.subr.mxu0 0.0
      %2036 = vmatpush1.msra.mxu0 0.0
      %2037 = vmatprep.subr.mxu0 0.0
      %2038 = vmatpush1.msra.mxu0 0.0
      %2039 = vmatprep.subr.mxu0 0.0
      %2040 = vmatpush1.msra.mxu0 0.0
      %2041 = vmatprep.subr.mxu0 0.0
      %2042 = vmatpush1.msra.mxu0 0.0
      %2043 = vmatprep.subr.mxu0 0.0
      %2044 = vmatpush1.msra.mxu0 0.0
      %2045 = vmatprep.subr.mxu0 0.0
      %2046 = vmatpush1.msra.mxu0 0.0
      %2047 = vmatprep.subr.mxu0 0.0
      %2048 = vmatpush1.msra.mxu0 0.0
      %2049 = vmatprep.subr.mxu0 0.0
      %2050 = vmatpush1.msra.mxu0 0.0
      %2051 = vmatprep.subr.mxu0 0.0
      %2052 = vmatpush1.msra.mxu0 0.0
      %2053 = vmatprep.subr.mxu0 0.0
      %2054 = vmatpush1.msra.mxu0 0.0
      %2055 = vmatprep.subr.mxu0 0.0
      %2056 = vmatpush1.msra.mxu0 0.0
      %2057 = vmatprep.subr.mxu0 0.0
      %2058 = vmatpush1.msra.mxu0 0.0
      %2059 = vmatprep.subr.mxu0 0.0
      %2060 = vmatpush1.msra.mxu0 0.0
      %2061 = vmatprep.subr.mxu0 0.0
      %2062 = vmatpush1.msra.mxu0 0.0
      %2063 = vmatprep.subr.mxu0 0.0
      %2064 = vmatpush1.msra.mxu0 0.0
      %2065 = vmatprep.subr.mxu0 0.0
      %2066 = vmatpush1.msra.mxu0 0.0
      %2067 = vmatprep.subr.mxu0 0.0
      %2068 = vmatpush1.msra.mxu0 0.0
      %2069 = vmatprep.subr.mxu0 0.0
      %2070 = vmatpush1.msra.mxu0 0.0
      %2071 = vmatprep.subr.mxu0 0.0
      %2072 = vmatpush1.msra.mxu0 0.0
      %2073 = vmatprep.subr.mxu0 0.0
      %2074 = vmatpush1.msra.mxu0 0.0
      %2075 = vmatprep.subr.mxu0 0.0
      %2076 = vmatpush1.msra.mxu0 0.0
      %2077 = vmatprep.subr.mxu0 0.0
      %2078 = vmatpush1.msra.mxu0 0.0
      %2079 = vmatprep.subr.mxu0 0.0
      %2080 = vmatpush1.msra.mxu0 0.0
      %2081 = vmatprep.subr.mxu0 0.0
      %2082 = vmatpush1.msra.mxu0 0.0
      %2083 = vmatprep.mubr.f32.mxu0 0.0
      %2084 = vmatmul.mubr.f32.gmra.mrb[0].mxu0 %v1981
      %v2085 = vpop.f32.mrb[0].mxu0
      %v2086 = vadd.f32 0.0, %v2085
      %v2087 = vpop.f32.mrb[0].mxu0
      %2088 = vmatprep.mubr.f32.mxu0 0.0
      %2089 = vmatmul.mubr.f32.gmra.mrb[0].mxu0 %v1984
      %v2090 = vpop.f32.mrb[0].mxu0
      %v2091 = vadd.f32 0.0, %v2090
      %v2092 = vpop.f32.mrb[0].mxu0
      %2093 = vmatprep.mubr.f32.mxu0 0.0
      %2094 = vmatmul.mubr.f32.gmra.mrb[0].mxu0 %v1987
      %v2095 = vpop.f32.mrb[0].mxu0
      %v2096 = vadd.f32 0.0, %v2095
      %v2097 = vpop.f32.mrb[0].mxu0
      %2098 = vmatprep.mubr.f32.mxu0 0.0
      %2099 = vmatmul.mubr.f32.gmra.mrb[0].mxu0 %v1990
      %v2100 = vpop.f32.mrb[0].mxu0
      %v2101 = vadd.f32 0.0, %v2100
      %v2102 = vpop.f32.mrb[0].mxu0
      %2103 = vmatprep.mubr.f32.mxu0 0.0
      %2104 = vmatmul.mubr.f32.gmra.mrb[0].mxu0 %v1993
      %v2105 = vpop.f32.mrb[0].mxu0
      %v2106 = vadd.f32 0.0, %v2105
      %v2107 = vpop.f32.mrb[0].mxu0
      %2108 = vmatprep.mubr.f32.mxu0 0.0
      %2109 = vmatmul.mubr.f32.gmra.mrb[0].mxu0 %v1996
      %v2110 = vpop.f32.mrb[0].mxu0
      %v2111 = vadd.f32 0.0, %v2110
      %v2112 = vpop.f32.mrb[0].mxu0
      %2113 = vmatprep.mubr.f32.mxu0 0.0
      %2114 = vmatmul.mubr.f32.gmra.mrb[0].mxu0 %v1999
      %v2115 = vpop.f32.mrb[0].mxu0
      %v2116 = vadd.f32 0.0, %v2115
      %v2117 = vpop.f32.mrb[0].mxu0
      %2118 = vmatprep.mubr.f32.mxu0 0.0
      %2119 = vmatmul.mubr.f32.gmra.mrb[0].mxu0 %v2002
      %v2120 = vpop.f32.mrb[0].mxu0
      %v2121 = vadd.f32 0.0, %v2120
      %v2122 = vpop.f32.mrb[0].mxu0
      %2123 = vmatprep.mubr.f32.mxu0 0.0
      %2124 = vmatmul.mubr.f32.gmra.mrb[0].mxu0 %v2005
      %v2125 = vpop.f32.mrb[0].mxu0
      %v2126 = vadd.f32 0.0, %v2125
      %v2127 = vpop.f32.mrb[0].mxu0
      %2128 = vmatprep.mubr.f32.mxu0 0.0
      %2129 = vmatmul.mubr.f32.gmra.mrb[0].mxu0 %v2008
      %v2130 = vpop.f32.mrb[0].mxu0
      %v2131 = vadd.f32 0.0, %v2130
      %v2132 = vpop.f32.mrb[0].mxu0
      %2133 = vmatprep.mubr.f32.mxu0 0.0
      %2134 = vmatmul.mubr.f32.gmra.mrb[0].mxu0 %v2011
      %v2135 = vpop.f32.mrb[0].mxu0
      %v2136 = vadd.f32 0.0, %v2135
      %v2137 = vpop.f32.mrb[0].mxu0
      %2138 = vmatprep.mubr.f32.mxu0 0.0
      %2139 = vmatmul.mubr.f32.gmra.mrb[0].mxu0 %v2014
      %v2140 = vpop.f32.mrb[0].mxu0
      %v2141 = vadd.f32 0.0, %v2140
      %v2142 = vpop.f32.mrb[0].mxu0
      %2143 = vmatprep.mubr.f32.mxu0 0.0
      %2144 = vmatmul.mubr.f32.gmra.mrb[0].mxu0 %v2017
      %v2145 = vpop.f32.mrb[0].mxu0
      %v2146 = vadd.f32 0.0, %v2145
      %v2147 = vpop.f32.mrb[0].mxu0
      %2148 = vdwg.mxu0
      %vm2151 = vcmask 1042432
      %v2152 = vrot.slane %v2086, 5
      %v2153 = vrot.slane %v2091, 5
      %v2154 = vsel %vm2151, %v2152, %v2153
      %2155 = vrot.lane.b32.xlu0 %v2154, 127
      %v2156 = vpop.permute.xlu0 %2155
      %v2158 = vadd.f32 %v2086, %v2156
      %v2159 = vrot.slane %v2091, 2
      %2160 = vrot.lane.b32.xlu0 %v2159, 126
      %v2161 = vpop.permute.xlu0 %2160
      %v2163 = vadd.f32 %v2158, %v2161
      %v2165 = vrot.slane %v2091, 7
      %v2166 = vrot.slane %v2096, 7
      %v2167 = vsel %vm1782, %v2165, %v2166
      %2168 = vrot.lane.b32.xlu0 %v2167, 125
      %v2169 = vpop.permute.xlu0 %2168
      %v2171 = vadd.f32 %v2163, %v2169
      %vm2173 = vcmask 1043456
      %v2174 = vrot.slane %v2096, 4
      %v2175 = vrot.slane %v2101, 4
      %v2176 = vsel %vm2173, %v2174, %v2175
      %2177 = vrot.lane.b32.xlu0 %v2176, 124
      %v2178 = vpop.permute.xlu0 %2177
      %v2180 = vadd.f32 %v2171, %v2178
      %v2181 = vrot.slane %v2101, 1
      %2182 = vrot.lane.b32.xlu0 %v2181, 123
      %v2183 = vpop.permute.xlu0 %2182
      %v2185 = vadd.f32 %v2180, %v2183
      %vm2187 = vcmask 1041408
      %v2188 = vrot.slane %v2101, 6
      %v2189 = vrot.slane %v2106, 6
      %v2190 = vsel %vm2187, %v2188, %v2189
      %2191 = vrot.lane.b32.xlu0 %v2190, 122
      %v2192 = vpop.permute.xlu0 %2191
      %v2194 = vadd.f32 %v2185, %v2192
      %v2195 = vrot.slane %v2106, 3
      %2196 = vrot.lane.b32.xlu0 %v2195, 121
      %v2197 = vpop.permute.xlu0 %2196
      %v2199 = vadd.f32 %v2194, %v2197
      %2201 = vrot.lane.b32.xlu0 %v2111, 120
      %v2202 = vpop.permute.xlu0 %2201
      %v2204 = vadd.f32 %v2199, %v2202
      %v2206 = vrot.slane %v2111, 5
      %v2207 = vrot.slane %v2116, 5
      %v2208 = vsel %vm2151, %v2206, %v2207
      %2209 = vrot.lane.b32.xlu0 %v2208, 119
      %v2210 = vpop.permute.xlu0 %2209
      %v2212 = vadd.f32 %v2204, %v2210
      %v2213 = vrot.slane %v2116, 2
      %2214 = vrot.lane.b32.xlu0 %v2213, 118
      %v2215 = vpop.permute.xlu0 %2214
      %v2217 = vadd.f32 %v2212, %v2215
      %v2219 = vrot.slane %v2116, 7
      %v2220 = vrot.slane %v2121, 7
      %v2221 = vsel %vm1782, %v2219, %v2220
      %2222 = vrot.lane.b32.xlu0 %v2221, 117
      %v2223 = vpop.permute.xlu0 %2222
      %v2225 = vadd.f32 %v2217, %v2223
      %v2227 = vrot.slane %v2121, 4
      %v2228 = vrot.slane %v2126, 4
      %v2229 = vsel %vm2173, %v2227, %v2228
      %2230 = vrot.lane.b32.xlu0 %v2229, 116
      %v2231 = vpop.permute.xlu0 %2230
      %v2233 = vadd.f32 %v2225, %v2231
      %v2234 = vrot.slane %v2126, 1
      %2235 = vrot.lane.b32.xlu0 %v2234, 115
      %v2236 = vpop.permute.xlu0 %2235
      %v2238 = vadd.f32 %v2233, %v2236
      %v2240 = vrot.slane %v2126, 6
      %v2241 = vrot.slane %v2131, 6
      %v2242 = vsel %vm2187, %v2240, %v2241
      %2243 = vrot.lane.b32.xlu0 %v2242, 114
      %v2244 = vpop.permute.xlu0 %2243
      %v2246 = vadd.f32 %v2238, %v2244
      %v2247 = vrot.slane %v2131, 3
      %2248 = vrot.lane.b32.xlu0 %v2247, 113
      %v2249 = vpop.permute.xlu0 %2248
      %v2251 = vadd.f32 %v2246, %v2249
      %2253 = vrot.lane.b32.xlu0 %v2136, 112
      %v2254 = vpop.permute.xlu0 %2253
      %v2256 = vadd.f32 %v2251, %v2254
      %v2258 = vrot.slane %v2136, 5
      %v2259 = vrot.slane %v2141, 5
      %v2260 = vsel %vm2151, %v2258, %v2259
      %2261 = vrot.lane.b32.xlu0 %v2260, 111
      %v2262 = vpop.permute.xlu0 %2261
      %v2264 = vadd.f32 %v2256, %v2262
      %v2265 = vrot.slane %v2141, 2
      %2266 = vrot.lane.b32.xlu0 %v2265, 110
      %v2267 = vpop.permute.xlu0 %2266
      %v2269 = vadd.f32 %v2264, %v2267
      %v2271 = vrot.slane %v2141, 7
      %v2272 = vrot.slane %v2146, 7
      %v2273 = vsel %vm1782, %v2271, %v2272
      %2274 = vrot.lane.b32.xlu0 %v2273, 109
      %v2275 = vpop.permute.xlu0 %2274
      %v2277 = vadd.f32 %v2269, %v2275
      %v2278 = vld [vmem:[%s3 + $0x28] sm:$0x1f]
      %2280 = vset.pattern.permute.xlu0 0
      %2281 = vperm.xlu0 %2280, %v2278
      %v2282 = vpop.permute.xlu0 %2281
      %v2284 = vadd.f32 %v2277, %v2282
      %vm2285 = vcmp.gt.f32.partialorder %v2284, 0.0
      %v2286 = vmin.f32 %v2284, 0.0
      %v2287 = vmul.f32 %v2286, 1.442695
      %v2288 = vpow.pop %v2287
      %v2289 = vsub.f32 %v2288, 1.0
      %v2290 = vsel %vm2285, %v2284, %v2289
      %v2291 = vld [vmem:[%s5] sm:$0xff]
      %v2292 = vld [vmem:[%s5 + $0x8] sm:$0xff]
      %v2293 = vld [vmem:[%s5 + $0x10] sm:$0xff]
      %v2294 = vld [vmem:[%s5 + $0x18] sm:$0xff]
      %v2295 = vld [vmem:[%s5 + $0x20] sm:$0xff]
      %v2297 = vsel %vm1979, %v2290, 0
      %2299 = vmatprep.subr.mxu0 0.0
      %2300 = vmatpush1.msra.mxu0 %v2291
      %2301 = vmatprep.subr.mxu0 0.0
      %2302 = vmatpush1.msra.mxu0 %v2292
      %2303 = vmatprep.subr.mxu0 0.0
      %2304 = vmatpush1.msra.mxu0 %v2293
      %2305 = vmatprep.subr.mxu0 0.0
      %2306 = vmatpush1.msra.mxu0 %v2294
      %2307 = vmatprep.subr.mxu0 0.0
      %2308 = vmatpush1.msra.mxu0 %v2295
      %2309 = vmatprep.subr.mxu0 0.0
      %2310 = vmatpush1.msra.mxu0 0.0
      %2311 = vmatprep.subr.mxu0 0.0
      %2312 = vmatpush1.msra.mxu0 0.0
      %2313 = vmatprep.subr.mxu0 0.0
      %2314 = vmatpush1.msra.mxu0 0.0
      %2315 = vmatprep.subr.mxu0 0.0
      %2316 = vmatpush1.msra.mxu0 0.0
      %2317 = vmatprep.subr.mxu0 0.0
      %2318 = vmatpush1.msra.mxu0 0.0
      %2319 = vmatprep.subr.mxu0 0.0
      %2320 = vmatpush1.msra.mxu0 0.0
      %2321 = vmatprep.subr.mxu0 0.0
      %2322 = vmatpush1.msra.mxu0 0.0
      %2323 = vmatprep.subr.mxu0 0.0
      %2324 = vmatpush1.msra.mxu0 0.0
      %2325 = vmatprep.subr.mxu0 0.0
      %2326 = vmatpush1.msra.mxu0 0.0
      %2327 = vmatprep.subr.mxu0 0.0
      %2328 = vmatpush1.msra.mxu0 0.0
      %2329 = vmatprep.subr.mxu0 0.0
      %2330 = vmatpush1.msra.mxu0 0.0
      %2331 = vmatprep.subr.mxu0 0.0
      %2332 = vmatpush1.msra.mxu0 0.0
      %2333 = vmatprep.subr.mxu0 0.0
      %2334 = vmatpush1.msra.mxu0 0.0
      %2335 = vmatprep.subr.mxu0 0.0
      %2336 = vmatpush1.msra.mxu0 0.0
      %2337 = vmatprep.subr.mxu0 0.0
      %2338 = vmatpush1.msra.mxu0 0.0
      %2339 = vmatprep.subr.mxu0 0.0
      %2340 = vmatpush1.msra.mxu0 0.0
      %2341 = vmatprep.subr.mxu0 0.0
      %2342 = vmatpush1.msra.mxu0 0.0
      %2343 = vmatprep.subr.mxu0 0.0
      %2344 = vmatpush1.msra.mxu0 0.0
      %2345 = vmatprep.subr.mxu0 0.0
      %2346 = vmatpush1.msra.mxu0 0.0
      %2347 = vmatprep.subr.mxu0 0.0
      %2348 = vmatpush1.msra.mxu0 0.0
      %2349 = vmatprep.subr.mxu0 0.0
      %2350 = vmatpush1.msra.mxu0 0.0
      %2351 = vmatprep.subr.mxu0 0.0
      %2352 = vmatpush1.msra.mxu0 0.0
      %2353 = vmatprep.subr.mxu0 0.0
      %2354 = vmatpush1.msra.mxu0 0.0
      %2355 = vmatprep.subr.mxu0 0.0
      %2356 = vmatpush1.msra.mxu0 0.0
      %2357 = vmatprep.subr.mxu0 0.0
      %2358 = vmatpush1.msra.mxu0 0.0
      %2359 = vmatprep.subr.mxu0 0.0
      %2360 = vmatpush1.msra.mxu0 0.0
      %2361 = vmatprep.subr.mxu0 0.0
      %2362 = vmatpush1.msra.mxu0 0.0
      %2363 = vmatprep.mubr.f32.mxu0 0.0
      %2364 = vmatmul.mubr.f32.gmra.mrb[0].mxu0 %v2297
      %v2365 = vpop.f32.mrb[0].mxu0
      %v2366 = vadd.f32 0.0, %v2365
      %v2367 = vpop.f32.mrb[0].mxu0
      %2368 = vdwg.mxu0
      %vm2369 = vcmask 45056
      %2370 = vst.msk [vmem:[%s249] sm:$0x1f] %vm2369, %v2366
      %p2371 = scmp.lt.s32.totalorder %s17, 1
      %s2372 = scalar_select %p2371, %s17, 1
      %s2373 = smul.addr %s2372, 8
      %s2374 = scalar_lea.vmem %s6, %s2373
      // Predicated region
      $region45: #{backbone_forward.1} parent=43 // pred_check
        %p2375 = pneg %p166
      $region46: #{backbone_forward.1} parent=43 // pred_check_branch
        %2377 = sbr.rel (%p2375) target = $region48
      $region47: #{backbone_forward.1} parent=43 // pred_region
        _
      $region48: #{backbone_forward.1} parent=43 // pred_fallthru
        _
    $region44: #{backbone_forward.1} parent=5 // pred_fallthru
      _
    %p2378 = scmp.le.s32.totalorder 2, %s12
    // Predicated region
    $region49: #{backbone_forward.1} parent=5 // pred_check
      %p2379 = pneg %p2378
    $region50: #{backbone_forward.1} parent=5 // pred_check_branch
      %2381 = sbr.rel (%p2379) target = $region52
    $region51: #{backbone_forward.1} parent=5 // pred_region
      %s2382 = ssub.s32 %s12, 2
      // Predicated region
      $region53: #{backbone_forward.1} parent=51 // pred_check
        %p2383 = pneg %p172
      $region54: #{backbone_forward.1} parent=51 // pred_check_branch
        %2385 = sbr.rel (%p2383) target = $region56
      $region55: #{backbone_forward.1} parent=51 // pred_region
        %p2386 = scmp.lt.s32.totalorder %s18, 1
        %s2387 = scalar_select %p2386, %s18, 1
        %s2388 = smul.addr %s2387, 8
        %s2389 = scalar_lea.vmem %s6, %s2388
      $region56: #{backbone_forward.1} parent=51 // pred_fallthru
        _
    $region52: #{backbone_forward.1} parent=5 // pred_fallthru
      _
  $region6: #{backbone_forward.1} parent=0 // loop_footer
    %s16 = sadd.s32 1, %s12
  $region7: #{backbone_forward.1} parent=0 // loop_footer_branch
    %11 = sbr.rel target = $region3
  $region8: #{backbone_forward.1} parent=0 // loop_exit
    _

</llo_original>
